<compile_context>
chip_gen: v6e
topology: v6e:2x2x1
jax: 0.10.0
libtpu: 0.0.40
codegen_flags: <defaults>
</compile_context>

<pallas_src>
import numpy as np
import jax
import jax.numpy as jnp
from jax import lax
from jax.experimental import pallas as pl
from jax.experimental.pallas import tpu as pltpu


# ----------------------------------------------------------------------------
# Fused kernel factory:  all LSTM layers + classifier head in one pallas_call
# ----------------------------------------------------------------------------
def make_fused_kernel(layers, time_tile, batch, units, classes):
    """Returns the kernel for a (T*B, Din)-flattened, time-tiled LSTM stack."""
    n_w = 3 * layers + 2          # (w_ih, w_hh, b) per layer + (w_out, b_out)
    B, U, Tt = batch, units, time_tile

    def kernel(x_ref, h0_ref, c0_ref, *args):
        w_refs = args[:n_w]
        z_ref, hN_ref, cN_ref = args[n_w], args[n_w + 1], args[n_w + 2]
        h_sc, c_sc, ybuf, xg_sc = args[n_w + 3], args[n_w + 4], args[n_w + 5], args[n_w + 6]

        t_blk = pl.program_id(0)
        n_blk = pl.num_programs(0)

        # --- initialize the recurrent state once, at the first time tile -----
        @pl.when(t_blk == 0)
        def _init():
            h_sc[...] = h0_ref[...].astype(jnp.float32)
            c_sc[...] = c0_ref[...].astype(jnp.float32)

        # lane mask selecting the g-gate (tanh) lanes of the (B, 4U) gate vector;
        # hoisted out of the time loop (JAX does not CSE broadcast_in_dim).
        lane = lax.broadcasted_iota(jnp.int32, (B, 4 * U), 1)
        is_g = jnp.logical_and(lane >= 2 * U, lane < 3 * U)

        for l in range(layers):
            # loop-invariant weight loads: once per tile, not once per timestep
            w_ih = w_refs[3 * l][...]
            w_hh = w_refs[3 * l + 1][...]
            b = w_refs[3 * l + 2][...]

            # layer input for this tile: raw x for layer 0, previous layer's
            # hidden outputs (kept in VMEM scratch) otherwise.  (Tt*B, Din_l)
            x_in = x_ref[...] if l == 0 else ybuf[...]

            # --- hoisted input projection: ONE big MXU matmul per tile -------
            # (Tt*B, Din) x (Din, 4U) + bias, stored to VMEM scratch so the
            # serial loop only does cheap per-step row loads.
            xg_sc[...] = (jnp.dot(x_in, w_ih, preferred_element_type=jnp.float32)
                          + b)

            def step(t, carry, l=l, w_hh=w_hh):
                h, c = carry
                off = pl.multiple_of(t * B, B)
                gates = (xg_sc[pl.ds(off, B), :]
                         + jnp.dot(h, w_hh, preferred_element_type=jnp.float32))
                # full-vreg activations: sigmoid everywhere, tanh on g lanes
                act = jnp.where(is_g, jnp.tanh(gates), jax.nn.sigmoid(gates))
                gi = act[:, 0 * U:1 * U]
                gf = act[:, 1 * U:2 * U]
                gg = act[:, 2 * U:3 * U]
                go = act[:, 3 * U:4 * U]
                c_new = gf * c + gi * gg
                h_new = go * jnp.tanh(c_new)
                if l < layers - 1:
                    ybuf[pl.ds(off, B), :] = h_new     # feed the next layer
                return h_new, c_new

            h_fin, c_fin = lax.fori_loop(0, Tt, step, (h_sc[l], c_sc[l]),
                                         unroll=(Tt <= 16))
            h_sc[l] = h_fin
            c_sc[l] = c_fin

        # --- fused classifier head + final-state writeback at the last tile --
        @pl.when(t_blk == n_blk - 1)
        def _head():
            w_out = w_refs[3 * layers][...]
            b_out = w_refs[3 * layers + 1][...]
            logits = (jnp.dot(h_sc[layers - 1], w_out,
                              preferred_element_type=jnp.float32) + b_out)
            m = jnp.max(logits, axis=-1, keepdims=True)
            shifted = logits - m
            lse = jnp.log(jnp.sum(jnp.exp(shifted), axis=-1, keepdims=True))
            z_ref[...] = (shifted - lse).astype(z_ref.dtype)
            hN_ref[...] = h_sc[...].astype(hN_ref.dtype)
            cN_ref[...] = c_sc[...].astype(cN_ref.dtype)

    return kernel


# ----------------------------------------------------------------------------
# Wrapper
# ----------------------------------------------------------------------------
def _nbytes(shape, dtype):
    return int(np.prod(shape)) * np.dtype(dtype).itemsize


def _pick_time_tile(T, B, cap=128):
    """Largest divisor of T (<= cap) whose tile keeps (Tt*B) sublane-aligned."""
    for tt in range(min(T, cap), 0, -1):
        if T % tt == 0 and (tt * B) % 8 == 0:
            return tt
    return T


def base_lstm_forward(input_data, params, hs, *, time_tile=None):
    """Mirrors baseLSTM.forward: x, hs = lstm(input, hs); z = log_softmax(linear(x[:, -1, :]))."""
    h0, c0 = hs
    B, T, C = input_data.shape
    L = len(params["lstm"])
    U = h0.shape[-1]
    classes = params["w_out"].shape[-1]
    dt = input_data.dtype

    if time_tile is None:
        time_tile = _pick_time_tile(T, B)
    assert T % time_tile == 0, "time_tile must divide the sequence length"
    n_blk = T // time_tile

    # time-major then flatten to (T*B, C): the streamed x tile arrives 2-D, so the
    # per-tile input projection is a single lane-dense matmul with no in-kernel reshape.
    x2d = jnp.transpose(input_data, (1, 0, 2)).reshape(T * B, C)

    w_list = []
    for lp in params["lstm"]:
        w_list += [lp["w_ih"], lp["w_hh"], lp["b"]]
    w_list += [params["w_out"], params["b_out"]]

    in_specs = [
        pl.BlockSpec((time_tile * B, C), lambda t: (t, 0)),      # streamed over T
        pl.BlockSpec((L, B, U), lambda t: (0, 0, 0)),            # h0
        pl.BlockSpec((L, B, U), lambda t: (0, 0, 0)),            # c0
    ]
    for w in w_list:                                             # weights, resident
        in_specs.append(pl.BlockSpec(w.shape, lambda t, n=w.ndim: (0,) * n))

    out_shape = (jax.ShapeDtypeStruct((B, classes), dt),
                 jax.ShapeDtypeStruct((L, B, U), h0.dtype),
                 jax.ShapeDtypeStruct((L, B, U), c0.dtype))
    out_specs = (pl.BlockSpec((B, classes), lambda t: (0, 0)),
                 pl.BlockSpec((L, B, U), lambda t: (0, 0, 0)),
                 pl.BlockSpec((L, B, U), lambda t: (0, 0, 0)))

    scratch_shapes = [
        pltpu.VMEM((L, B, U), jnp.float32),              # h state (persists over grid)
        pltpu.VMEM((L, B, U), jnp.float32),              # c state
        pltpu.VMEM((time_tile * B, U), jnp.float32),     # inter-layer hidden slab
        pltpu.VMEM((time_tile * B, 4 * U), jnp.float32), # hoisted input projection
    ]

    # Explicit VMEM budget derived from the actual resident buffers (+headroom),
    # clamped so it is legal on v7x's 64 MiB physical VMEM as well as v5e/v6e.
    est = 2 * _nbytes((time_tile * B, C), dt)                        # x tile, dbl-buffered
    est += 4 * _nbytes((L, B, U), h0.dtype)                          # h0, c0
    for w in w_list:
        est += 2 * _nbytes(w.shape, w.dtype)
    est += 2 * (_nbytes((B, classes), dt) + 2 * _nbytes((L, B, U), h0.dtype))
    est += sum(_nbytes(s.shape, jnp.float32) for s in scratch_shapes)
    vmem_limit = int(min(64 << 20, max(16 << 20, 2 * est + (2 << 20))))

    kernel = make_fused_kernel(L, time_tile, B, U, classes)

    z, hN, cN = pl.pallas_call(
        kernel,
        out_shape=out_shape,
        grid_spec=pltpu.PrefetchScalarGridSpec(
            num_scalar_prefetch=0,
            grid=(n_blk,),
            in_specs=in_specs,
            out_specs=out_specs,
            scratch_shapes=scratch_shapes),
        compiler_params=pltpu.CompilerParams(
            dimension_semantics=("arbitrary",),     # time recurrence is serial
            vmem_limit_bytes=vmem_limit),
    )(x2d, h0, c0, *w_list)

    return z, (hN, cN)


# ----------------------------------------------------------------------------
# Pure-JAX reference (for correctness checking)
# ----------------------------------------------------------------------------
def ref_forward(input_data, params, hs):
    h0, c0 = hs
    B, T, _ = input_data.shape
    layer_in = input_data
    h_fin, c_fin = [], []
    for l, lp in enumerate(params["lstm"]):
        U = h0.shape[-1]
        w_ih, w_hh, b = lp["w_ih"], lp["w_hh"], lp["b"][0]
        ht, ct = h0[l], c0[l]
        outs = []
        for t in range(T):
            g = layer_in[:, t, :] @ w_ih + ht @ w_hh + b
            i = jax.nn.sigmoid(g[:, 0 * U:1 * U])
            f = jax.nn.sigmoid(g[:, 1 * U:2 * U])
            gg = jnp.tanh(g[:, 2 * U:3 * U])
            o = jax.nn.sigmoid(g[:, 3 * U:4 * U])
            ct = f * ct + i * gg
            ht = o * jnp.tanh(ct)
            outs.append(ht)
        layer_in = jnp.stack(outs, axis=1)
        h_fin.append(ht)
        c_fin.append(ct)
    logits = layer_in[:, -1, :] @ params["w_out"] + params["b_out"][0]
    z = jax.nn.log_softmax(logits, axis=1)
    return z, (jnp.stack(h_fin, 0), jnp.stack(c_fin, 0))


# ----------------------------------------------------------------------------
# Deterministic parameter / state construction (mirrors __init__ shapes)
# ----------------------------------------------------------------------------
def make_params(key, channels, units, layers, classes):
    k = 1.0 / np.sqrt(units)
    params = {"lstm": []}
    for l in range(layers):
        din = channels if l == 0 else units
        key, k1, k2, k3, k4 = jax.random.split(key, 5)
        # stored pre-transposed: (din, 4U) / (U, 4U); gate order [i, f, g, o]
        w_ih = jax.random.uniform(k1, (din, 4 * units), jnp.float32, -k, k)
        w_hh = jax.random.uniform(k2, (units, 4 * units), jnp.float32, -k, k)
        b_ih = jax.random.uniform(k3, (4 * units,), jnp.float32, -k, k)
        b_hh = jax.random.uniform(k4, (4 * units,), jnp.float32, -k, k)
        params["lstm"].append({"w_ih": w_ih, "w_hh": w_hh,
                               "b": (b_ih + b_hh).reshape(1, -1)})
    key, k5, k6 = jax.random.split(key, 3)
    kl = 1.0 / np.sqrt(units)
    params["w_out"] = jax.random.uniform(k5, (units, classes), jnp.float32, -kl, kl)
    params["b_out"] = jax.random.uniform(k6, (1, classes), jnp.float32, -kl, kl)
    return params


def init_hidden(key, layers, batch_size, units):
    # orthogonal init per layer slice, like nn.init.orthogonal_ on (layers, B, U)
    ortho = jax.nn.initializers.orthogonal()
    hxs, cxs = [], []
    for l in range(layers):
        key, kh, kc = jax.random.split(key, 3)
        hxs.append(ortho(kh, (batch_size, units), jnp.float32))
        cxs.append(ortho(kc, (batch_size, units), jnp.float32))
    return jnp.stack(hxs, 0), jnp.stack(cxs, 0)


# ----------------------------------------------------------------------------
if __name__ == "__main__":
    # baseLSTM(units=32, layers=2, batch_size=2, drp_rate=0.2, channels=4, classes=5)
    units, layers, batch, channels, classes, seq = 32, 2, 2, 4, 5, 8

    root = jax.random.PRNGKey(0)
    k_params, k_hidden, k_input = jax.random.split(root, 3)

    params = make_params(k_params, channels, units, layers, classes)
    hs = init_hidden(k_hidden, layers, batch, units)
    # input_data: (batch, seq, channels) — batch_first=True
    x = jax.random.normal(k_input, (batch, seq, channels), jnp.float32)

    # time_tile=4 -> 2 grid steps, exercising the state carry across time tiles.
    fwd = jax.jit(lambda xx, pp, ss: base_lstm_forward(xx, pp, ss, time_tile=4))
    z, new_hs = fwd(x, params, hs)
    z = jax.block_until_ready(z)
    jax.block_until_ready(new_hs)

    z_ref, (h_ref, c_ref) = ref_forward(x, params, hs)
    np.testing.assert_allclose(np.asarray(z), np.asarray(z_ref),
                               rtol=1e-5, atol=1e-5)
    np.testing.assert_allclose(np.asarray(new_hs[0]), np.asarray(h_ref),
                               rtol=1e-5, atol=1e-5)
    np.testing.assert_allclose(np.asarray(new_hs[1]), np.asarray(c_ref),
                               rtol=1e-5, atol=1e-5)
    assert z.shape == (batch, classes)

    print("KERNEL_OK")
</pallas_src>

<mosaic_0001>
module attributes {stable_mosaic.version = 11 : i64} {
  func.func @kernel(%arg0: i32, %arg1: memref<8x4xf32, #tpu.memory_space<vmem>>, %arg2: memref<2x2x32xf32, #tpu.memory_space<vmem>>, %arg3: memref<2x2x32xf32, #tpu.memory_space<vmem>>, %arg4: memref<4x128xf32, #tpu.memory_space<vmem>>, %arg5: memref<32x128xf32, #tpu.memory_space<vmem>>, %arg6: memref<1x128xf32, #tpu.memory_space<vmem>>, %arg7: memref<32x128xf32, #tpu.memory_space<vmem>>, %arg8: memref<32x128xf32, #tpu.memory_space<vmem>>, %arg9: memref<1x128xf32, #tpu.memory_space<vmem>>, %arg10: memref<32x5xf32, #tpu.memory_space<vmem>>, %arg11: memref<1x5xf32, #tpu.memory_space<vmem>>, %arg12: memref<2x5xf32, #tpu.memory_space<vmem>>, %arg13: memref<2x2x32xf32, #tpu.memory_space<vmem>>, %arg14: memref<2x2x32xf32, #tpu.memory_space<vmem>>, %arg15: memref<2x2x32xf32, #tpu.memory_space<vmem>>, %arg16: memref<2x2x32xf32, #tpu.memory_space<vmem>>, %arg17: memref<8x32xf32, #tpu.memory_space<vmem>>, %arg18: memref<8x128xf32, #tpu.memory_space<vmem>>) attributes {dimension_semantics = [#tpu.dimension_semantics<arbitrary>], iteration_bounds = array<i64: 2>, scalar_prefetch = 0 : i64, scratch_operands = 4 : i64, tpu.core_type = #tpu.core_type<tc>, window_params = [{transform_indices = @transform_0, window_bounds = array<i64: 8, 4>}, {pipeline_mode = #tpu.pipeline_mode<synchronous>, transform_indices = @transform_1, window_bounds = array<i64: 2, 2, 32>}, {pipeline_mode = #tpu.pipeline_mode<synchronous>, transform_indices = @transform_2, window_bounds = array<i64: 2, 2, 32>}, {pipeline_mode = #tpu.pipeline_mode<synchronous>, transform_indices = @transform_3, window_bounds = array<i64: 4, 128>}, {pipeline_mode = #tpu.pipeline_mode<synchronous>, transform_indices = @transform_4, window_bounds = array<i64: 32, 128>}, {pipeline_mode = #tpu.pipeline_mode<synchronous>, transform_indices = @transform_5, window_bounds = array<i64: 1, 128>}, {pipeline_mode = #tpu.pipeline_mode<synchronous>, transform_indices = @transform_6, window_bounds = array<i64: 32, 128>}, {pipeline_mode = #tpu.pipeline_mode<synchronous>, transform_indices = @transform_7, window_bounds = array<i64: 32, 128>}, {pipeline_mode = #tpu.pipeline_mode<synchronous>, transform_indices = @transform_8, window_bounds = array<i64: 1, 128>}, {pipeline_mode = #tpu.pipeline_mode<synchronous>, transform_indices = @transform_9, window_bounds = array<i64: 32, 5>}, {pipeline_mode = #tpu.pipeline_mode<synchronous>, transform_indices = @transform_10, window_bounds = array<i64: 1, 5>}, {pipeline_mode = #tpu.pipeline_mode<synchronous>, transform_indices = @transform_11, window_bounds = array<i64: 2, 5>}, {pipeline_mode = #tpu.pipeline_mode<synchronous>, transform_indices = @transform_12, window_bounds = array<i64: 2, 2, 32>}, {pipeline_mode = #tpu.pipeline_mode<synchronous>, transform_indices = @transform_13, window_bounds = array<i64: 2, 2, 32>}]} {
    %c0_i32 = arith.constant 0 : i32
    %0 = arith.cmpi eq, %arg0, %c0_i32 : i32
    %1 = arith.extui %0 : i1 to i32
    %c0_i32_0 = arith.constant 0 : i32
    %2 = arith.cmpi ne, %1, %c0_i32_0 : i32
    scf.if %2 {
      %c0_88 = arith.constant 0 : index
      %c0_89 = arith.constant 0 : index
      %c0_90 = arith.constant 0 : index
      %232 = vector.load %arg2[%c0_88, %c0_89, %c0_90] : memref<2x2x32xf32, #tpu.memory_space<vmem>>, vector<2x2x32xf32>
      %c0_91 = arith.constant 0 : index
      %c0_92 = arith.constant 0 : index
      %c0_93 = arith.constant 0 : index
      %233 = vector.load %arg15[%c0_91, %c0_92, %c0_93] : memref<2x2x32xf32, #tpu.memory_space<vmem>>, vector<2x2x32xf32>
      tpu.vector_store %arg15[%c0_91, %c0_92, %c0_93], %232 {strides = array<i32>} : memref<2x2x32xf32, #tpu.memory_space<vmem>>, vector<2x2x32xf32>,
      %c0_94 = arith.constant 0 : index
      %c0_95 = arith.constant 0 : index
      %c0_96 = arith.constant 0 : index
      %234 = vector.load %arg3[%c0_94, %c0_95, %c0_96] : memref<2x2x32xf32, #tpu.memory_space<vmem>>, vector<2x2x32xf32>
      %c0_97 = arith.constant 0 : index
      %c0_98 = arith.constant 0 : index
      %c0_99 = arith.constant 0 : index
      %235 = vector.load %arg16[%c0_97, %c0_98, %c0_99] : memref<2x2x32xf32, #tpu.memory_space<vmem>>, vector<2x2x32xf32>
      tpu.vector_store %arg16[%c0_97, %c0_98, %c0_99], %234 {strides = array<i32>} : memref<2x2x32xf32, #tpu.memory_space<vmem>>, vector<2x2x32xf32>,
    } else {
    }
    %3 = tpu.iota {dimensions = array<i32: 1>} : vector<2x128xi32>
    %c64_i32 = arith.constant 64 : i32
    %4 = vector.broadcast %c64_i32 : i32 to vector<2x128xi32>
    %5 = arith.cmpi sge, %3, %4 : vector<2x128xi32>
    %c96_i32 = arith.constant 96 : i32
    %6 = vector.broadcast %c96_i32 : i32 to vector<2x128xi32>
    %7 = arith.cmpi slt, %3, %6 : vector<2x128xi32>
    %8 = arith.andi %5, %7 : vector<2x128xi1>
    %c0 = arith.constant 0 : index
    %c0_1 = arith.constant 0 : index
    %9 = vector.load %arg4[%c0, %c0_1] : memref<4x128xf32, #tpu.memory_space<vmem>>, vector<4x128xf32>
    %c0_2 = arith.constant 0 : index
    %c0_3 = arith.constant 0 : index
    %10 = vector.load %arg5[%c0_2, %c0_3] : memref<32x128xf32, #tpu.memory_space<vmem>>, vector<32x128xf32>
    %c0_4 = arith.constant 0 : index
    %c0_5 = arith.constant 0 : index
    %11 = vector.load %arg6[%c0_4, %c0_5] : memref<1x128xf32, #tpu.memory_space<vmem>>, vector<1x128xf32>
    %c0_6 = arith.constant 0 : index
    %c0_7 = arith.constant 0 : index
    %12 = vector.load %arg1[%c0_6, %c0_7] : memref<8x4xf32, #tpu.memory_space<vmem>>, vector<8x4xf32>
    %cst = arith.constant dense<0.000000e+00> : vector<8x128xf32>
    %13 = tpu.matmul %12, %9, %cst {dimension_numbers = #tpu.dot_dimension_numbers<[1], [0], [0], [1], [0, 0, 1, 1], [], []>} : vector<8x4xf32>, vector<4x128xf32>, vector<8x128xf32> -> vector<8x128xf32>
    %14 = vector.broadcast %11 : vector<1x128xf32> to vector<8x128xf32>
    %15 = arith.addf %13, %14 : vector<8x128xf32>
    %c0_8 = arith.constant 0 : index
    %c0_9 = arith.constant 0 : index
    %16 = vector.load %arg18[%c0_8, %c0_9] : memref<8x128xf32, #tpu.memory_space<vmem>>, vector<8x128xf32>
    tpu.vector_store %arg18[%c0_8, %c0_9], %15 {strides = array<i32>} : memref<8x128xf32, #tpu.memory_space<vmem>>, vector<8x128xf32>,
    %c0_10 = arith.constant 0 : index
    %c0_11 = arith.constant 0 : index
    %c0_12 = arith.constant 0 : index
    %17 = vector.load %arg15[%c0_10, %c0_11, %c0_12] : memref<2x2x32xf32, #tpu.memory_space<vmem>>, vector<1x2x32xf32>
    %18 = vector.shape_cast %17 : vector<1x2x32xf32> to vector<2x32xf32>
    %c0_13 = arith.constant 0 : index
    %c0_14 = arith.constant 0 : index
    %c0_15 = arith.constant 0 : index
    %19 = vector.load %arg16[%c0_13, %c0_14, %c0_15] : memref<2x2x32xf32, #tpu.memory_space<vmem>>, vector<1x2x32xf32>
    %20 = vector.shape_cast %19 : vector<1x2x32xf32> to vector<2x32xf32>
    %c0_i32_16 = arith.constant 0 : i32
    %c2_i32 = arith.constant 2 : i32
    %21 = arith.muli %c0_i32_16, %c2_i32 : i32
    %22 = tpu.assume_multiple %21, 2 : i32
    %23 = arith.index_cast %22 : i32 to index
    %c0_17 = arith.constant 0 : index
    %24 = vector.load %arg18[%23, %c0_17] : memref<8x128xf32, #tpu.memory_space<vmem>>, vector<2x128xf32>
    %cst_18 = arith.constant dense<0.000000e+00> : vector<2x128xf32>
    %25 = tpu.matmul %18, %10, %cst_18 {dimension_numbers = #tpu.dot_dimension_numbers<[1], [0], [0], [1], [0, 0, 1, 1], [], []>} : vector<2x32xf32>, vector<32x128xf32>, vector<2x128xf32> -> vector<2x128xf32>
    %26 = arith.addf %24, %25 : vector<2x128xf32>
    %27 = math.tanh %26 : vector<2x128xf32>
    %28 = arith.negf %26 : vector<2x128xf32>
    %29 = math.exp %28 : vector<2x128xf32>
    %cst_19 = arith.constant 1.000000e+00 : f32
    %30 = vector.broadcast %cst_19 : f32 to vector<2x128xf32>
    %31 = arith.addf %30, %29 : vector<2x128xf32>
    %32 = arith.divf %30, %31 : vector<2x128xf32>
    %33 = arith.select %8, %27, %32 : vector<2x128xi1>, vector<2x128xf32>
    %34 = vector.extract_strided_slice %33 {offsets = [0, 0], sizes = [2, 32], strides = [1, 1]} : vector<2x128xf32> to vector<2x32xf32>
    %35 = vector.extract_strided_slice %33 {offsets = [0, 32], sizes = [2, 32], strides = [1, 1]} : vector<2x128xf32> to vector<2x32xf32>
    %36 = vector.extract_strided_slice %33 {offsets = [0, 64], sizes = [2, 32], strides = [1, 1]} : vector<2x128xf32> to vector<2x32xf32>
    %37 = vector.extract_strided_slice %33 {offsets = [0, 96], sizes = [2, 32], strides = [1, 1]} : vector<2x128xf32> to vector<2x32xf32>
    %38 = arith.mulf %35, %20 : vector<2x32xf32>
    %39 = arith.mulf %34, %36 : vector<2x32xf32>
    %40 = arith.addf %38, %39 : vector<2x32xf32>
    %41 = math.tanh %40 : vector<2x32xf32>
    %42 = arith.mulf %37, %41 : vector<2x32xf32>
    %43 = arith.index_cast %22 : i32 to index
    %c0_20 = arith.constant 0 : index
    %44 = vector.load %arg17[%43, %c0_20] : memref<8x32xf32, #tpu.memory_space<vmem>>, vector<2x32xf32>
    tpu.vector_store %arg17[%43, %c0_20], %42 {strides = array<i32>} : memref<8x32xf32, #tpu.memory_space<vmem>>, vector<2x32xf32>,
    %c1_i32 = arith.constant 1 : i32
    %c2_i32_21 = arith.constant 2 : i32
    %45 = arith.muli %c1_i32, %c2_i32_21 : i32
    %46 = tpu.assume_multiple %45, 2 : i32
    %47 = arith.index_cast %46 : i32 to index
    %c0_22 = arith.constant 0 : index
    %48 = vector.load %arg18[%47, %c0_22] : memref<8x128xf32, #tpu.memory_space<vmem>>, vector<2x128xf32>
    %cst_23 = arith.constant dense<0.000000e+00> : vector<2x128xf32>
    %49 = tpu.matmul %42, %10, %cst_23 {dimension_numbers = #tpu.dot_dimension_numbers<[1], [0], [0], [1], [0, 0, 1, 1], [], []>} : vector<2x32xf32>, vector<32x128xf32>, vector<2x128xf32> -> vector<2x128xf32>
    %50 = arith.addf %48, %49 : vector<2x128xf32>
    %51 = math.tanh %50 : vector<2x128xf32>
    %52 = arith.negf %50 : vector<2x128xf32>
    %53 = math.exp %52 : vector<2x128xf32>
    %cst_24 = arith.constant 1.000000e+00 : f32
    %54 = vector.broadcast %cst_24 : f32 to vector<2x128xf32>
    %55 = arith.addf %54, %53 : vector<2x128xf32>
    %56 = arith.divf %54, %55 : vector<2x128xf32>
    %57 = arith.select %8, %51, %56 : vector<2x128xi1>, vector<2x128xf32>
    %58 = vector.extract_strided_slice %57 {offsets = [0, 0], sizes = [2, 32], strides = [1, 1]} : vector<2x128xf32> to vector<2x32xf32>
    %59 = vector.extract_strided_slice %57 {offsets = [0, 32], sizes = [2, 32], strides = [1, 1]} : vector<2x128xf32> to vector<2x32xf32>
    %60 = vector.extract_strided_slice %57 {offsets = [0, 64], sizes = [2, 32], strides = [1, 1]} : vector<2x128xf32> to vector<2x32xf32>
    %61 = vector.extract_strided_slice %57 {offsets = [0, 96], sizes = [2, 32], strides = [1, 1]} : vector<2x128xf32> to vector<2x32xf32>
    %62 = arith.mulf %59, %40 : vector<2x32xf32>
    %63 = arith.mulf %58, %60 : vector<2x32xf32>
    %64 = arith.addf %62, %63 : vector<2x32xf32>
    %65 = math.tanh %64 : vector<2x32xf32>
    %66 = arith.mulf %61, %65 : vector<2x32xf32>
    %67 = arith.index_cast %46 : i32 to index
    %c0_25 = arith.constant 0 : index
    %68 = vector.load %arg17[%67, %c0_25] : memref<8x32xf32, #tpu.memory_space<vmem>>, vector<2x32xf32>
    tpu.vector_store %arg17[%67, %c0_25], %66 {strides = array<i32>} : memref<8x32xf32, #tpu.memory_space<vmem>>, vector<2x32xf32>,
    %c2_i32_26 = arith.constant 2 : i32
    %c2_i32_27 = arith.constant 2 : i32
    %69 = arith.muli %c2_i32_26, %c2_i32_27 : i32
    %70 = tpu.assume_multiple %69, 2 : i32
    %71 = arith.index_cast %70 : i32 to index
    %c0_28 = arith.constant 0 : index
    %72 = vector.load %arg18[%71, %c0_28] : memref<8x128xf32, #tpu.memory_space<vmem>>, vector<2x128xf32>
    %cst_29 = arith.constant dense<0.000000e+00> : vector<2x128xf32>
    %73 = tpu.matmul %66, %10, %cst_29 {dimension_numbers = #tpu.dot_dimension_numbers<[1], [0], [0], [1], [0, 0, 1, 1], [], []>} : vector<2x32xf32>, vector<32x128xf32>, vector<2x128xf32> -> vector<2x128xf32>
    %74 = arith.addf %72, %73 : vector<2x128xf32>
    %75 = math.tanh %74 : vector<2x128xf32>
    %76 = arith.negf %74 : vector<2x128xf32>
    %77 = math.exp %76 : vector<2x128xf32>
    %cst_30 = arith.constant 1.000000e+00 : f32
    %78 = vector.broadcast %cst_30 : f32 to vector<2x128xf32>
    %79 = arith.addf %78, %77 : vector<2x128xf32>
    %80 = arith.divf %78, %79 : vector<2x128xf32>
    %81 = arith.select %8, %75, %80 : vector<2x128xi1>, vector<2x128xf32>
    %82 = vector.extract_strided_slice %81 {offsets = [0, 0], sizes = [2, 32], strides = [1, 1]} : vector<2x128xf32> to vector<2x32xf32>
    %83 = vector.extract_strided_slice %81 {offsets = [0, 32], sizes = [2, 32], strides = [1, 1]} : vector<2x128xf32> to vector<2x32xf32>
    %84 = vector.extract_strided_slice %81 {offsets = [0, 64], sizes = [2, 32], strides = [1, 1]} : vector<2x128xf32> to vector<2x32xf32>
    %85 = vector.extract_strided_slice %81 {offsets = [0, 96], sizes = [2, 32], strides = [1, 1]} : vector<2x128xf32> to vector<2x32xf32>
    %86 = arith.mulf %83, %64 : vector<2x32xf32>
    %87 = arith.mulf %82, %84 : vector<2x32xf32>
    %88 = arith.addf %86, %87 : vector<2x32xf32>
    %89 = math.tanh %88 : vector<2x32xf32>
    %90 = arith.mulf %85, %89 : vector<2x32xf32>
    %91 = arith.index_cast %70 : i32 to index
    %c0_31 = arith.constant 0 : index
    %92 = vector.load %arg17[%91, %c0_31] : memref<8x32xf32, #tpu.memory_space<vmem>>, vector<2x32xf32>
    tpu.vector_store %arg17[%91, %c0_31], %90 {strides = array<i32>} : memref<8x32xf32, #tpu.memory_space<vmem>>, vector<2x32xf32>,
    %c3_i32 = arith.constant 3 : i32
    %c2_i32_32 = arith.constant 2 : i32
    %93 = arith.muli %c3_i32, %c2_i32_32 : i32
    %94 = tpu.assume_multiple %93, 2 : i32
    %95 = arith.index_cast %94 : i32 to index
    %c0_33 = arith.constant 0 : index
    %96 = vector.load %arg18[%95, %c0_33] : memref<8x128xf32, #tpu.memory_space<vmem>>, vector<2x128xf32>
    %cst_34 = arith.constant dense<0.000000e+00> : vector<2x128xf32>
    %97 = tpu.matmul %90, %10, %cst_34 {dimension_numbers = #tpu.dot_dimension_numbers<[1], [0], [0], [1], [0, 0, 1, 1], [], []>} : vector<2x32xf32>, vector<32x128xf32>, vector<2x128xf32> -> vector<2x128xf32>
    %98 = arith.addf %96, %97 : vector<2x128xf32>
    %99 = math.tanh %98 : vector<2x128xf32>
    %100 = arith.negf %98 : vector<2x128xf32>
    %101 = math.exp %100 : vector<2x128xf32>
    %cst_35 = arith.constant 1.000000e+00 : f32
    %102 = vector.broadcast %cst_35 : f32 to vector<2x128xf32>
    %103 = arith.addf %102, %101 : vector<2x128xf32>
    %104 = arith.divf %102, %103 : vector<2x128xf32>
    %105 = arith.select %8, %99, %104 : vector<2x128xi1>, vector<2x128xf32>
    %106 = vector.extract_strided_slice %105 {offsets = [0, 0], sizes = [2, 32], strides = [1, 1]} : vector<2x128xf32> to vector<2x32xf32>
    %107 = vector.extract_strided_slice %105 {offsets = [0, 32], sizes = [2, 32], strides = [1, 1]} : vector<2x128xf32> to vector<2x32xf32>
    %108 = vector.extract_strided_slice %105 {offsets = [0, 64], sizes = [2, 32], strides = [1, 1]} : vector<2x128xf32> to vector<2x32xf32>
    %109 = vector.extract_strided_slice %105 {offsets = [0, 96], sizes = [2, 32], strides = [1, 1]} : vector<2x128xf32> to vector<2x32xf32>
    %110 = arith.mulf %107, %88 : vector<2x32xf32>
    %111 = arith.mulf %106, %108 : vector<2x32xf32>
    %112 = arith.addf %110, %111 : vector<2x32xf32>
    %113 = math.tanh %112 : vector<2x32xf32>
    %114 = arith.mulf %109, %113 : vector<2x32xf32>
    %115 = arith.index_cast %94 : i32 to index
    %c0_36 = arith.constant 0 : index
    %116 = vector.load %arg17[%115, %c0_36] : memref<8x32xf32, #tpu.memory_space<vmem>>, vector<2x32xf32>
    tpu.vector_store %arg17[%115, %c0_36], %114 {strides = array<i32>} : memref<8x32xf32, #tpu.memory_space<vmem>>, vector<2x32xf32>,
    %c4_i32 = arith.constant 4 : i32
    %c0_37 = arith.constant 0 : index
    %c0_38 = arith.constant 0 : index
    %c0_39 = arith.constant 0 : index
    %117 = vector.load %arg15[%c0_37, %c0_38, %c0_39] : memref<2x2x32xf32, #tpu.memory_space<vmem>>, vector<1x2x32xf32>
    %118 = vector.shape_cast %117 : vector<1x2x32xf32> to vector<2x32xf32>
    %119 = vector.shape_cast %114 : vector<2x32xf32> to vector<1x2x32xf32>
    tpu.vector_store %arg15[%c0_37, %c0_38, %c0_39], %119 {strides = array<i32>} : memref<2x2x32xf32, #tpu.memory_space<vmem>>, vector<1x2x32xf32>,
    %c0_40 = arith.constant 0 : index
    %c0_41 = arith.constant 0 : index
    %c0_42 = arith.constant 0 : index
    %120 = vector.load %arg16[%c0_40, %c0_41, %c0_42] : memref<2x2x32xf32, #tpu.memory_space<vmem>>, vector<1x2x32xf32>
    %121 = vector.shape_cast %120 : vector<1x2x32xf32> to vector<2x32xf32>
    %122 = vector.shape_cast %112 : vector<2x32xf32> to vector<1x2x32xf32>
    tpu.vector_store %arg16[%c0_40, %c0_41, %c0_42], %122 {strides = array<i32>} : memref<2x2x32xf32, #tpu.memory_space<vmem>>, vector<1x2x32xf32>,
    %c0_43 = arith.constant 0 : index
    %c0_44 = arith.constant 0 : index
    %123 = vector.load %arg7[%c0_43, %c0_44] : memref<32x128xf32, #tpu.memory_space<vmem>>, vector<32x128xf32>
    %c0_45 = arith.constant 0 : index
    %c0_46 = arith.constant 0 : index
    %124 = vector.load %arg8[%c0_45, %c0_46] : memref<32x128xf32, #tpu.memory_space<vmem>>, vector<32x128xf32>
    %c0_47 = arith.constant 0 : index
    %c0_48 = arith.constant 0 : index
    %125 = vector.load %arg9[%c0_47, %c0_48] : memref<1x128xf32, #tpu.memory_space<vmem>>, vector<1x128xf32>
    %c0_49 = arith.constant 0 : index
    %c0_50 = arith.constant 0 : index
    %126 = vector.load %arg17[%c0_49, %c0_50] : memref<8x32xf32, #tpu.memory_space<vmem>>, vector<8x32xf32>
    %cst_51 = arith.constant dense<0.000000e+00> : vector<8x128xf32>
    %127 = tpu.matmul %126, %123, %cst_51 {dimension_numbers = #tpu.dot_dimension_numbers<[1], [0], [0], [1], [0, 0, 1, 1], [], []>} : vector<8x32xf32>, vector<32x128xf32>, vector<8x128xf32> -> vector<8x128xf32>
    %128 = vector.broadcast %125 : vector<1x128xf32> to vector<8x128xf32>
    %129 = arith.addf %127, %128 : vector<8x128xf32>
    %c0_52 = arith.constant 0 : index
    %c0_53 = arith.constant 0 : index
    %130 = vector.load %arg18[%c0_52, %c0_53] : memref<8x128xf32, #tpu.memory_space<vmem>>, vector<8x128xf32>
    tpu.vector_store %arg18[%c0_52, %c0_53], %129 {strides = array<i32>} : memref<8x128xf32, #tpu.memory_space<vmem>>, vector<8x128xf32>,
    %c1 = arith.constant 1 : index
    %c0_54 = arith.constant 0 : index
    %c0_55 = arith.constant 0 : index
    %131 = vector.load %arg15[%c1, %c0_54, %c0_55] : memref<2x2x32xf32, #tpu.memory_space<vmem>>, vector<1x2x32xf32>
    %132 = vector.shape_cast %131 : vector<1x2x32xf32> to vector<2x32xf32>
    %c1_56 = arith.constant 1 : index
    %c0_57 = arith.constant 0 : index
    %c0_58 = arith.constant 0 : index
    %133 = vector.load %arg16[%c1_56, %c0_57, %c0_58] : memref<2x2x32xf32, #tpu.memory_space<vmem>>, vector<1x2x32xf32>
    %134 = vector.shape_cast %133 : vector<1x2x32xf32> to vector<2x32xf32>
    %c0_i32_59 = arith.constant 0 : i32
    %c2_i32_60 = arith.constant 2 : i32
    %135 = arith.muli %c0_i32_59, %c2_i32_60 : i32
    %136 = tpu.assume_multiple %135, 2 : i32
    %137 = arith.index_cast %136 : i32 to index
    %c0_61 = arith.constant 0 : index
    %138 = vector.load %arg18[%137, %c0_61] : memref<8x128xf32, #tpu.memory_space<vmem>>, vector<2x128xf32>
    %cst_62 = arith.constant dense<0.000000e+00> : vector<2x128xf32>
    %139 = tpu.matmul %132, %124, %cst_62 {dimension_numbers = #tpu.dot_dimension_numbers<[1], [0], [0], [1], [0, 0, 1, 1], [], []>} : vector<2x32xf32>, vector<32x128xf32>, vector<2x128xf32> -> vector<2x128xf32>
    %140 = arith.addf %138, %139 : vector<2x128xf32>
    %141 = math.tanh %140 : vector<2x128xf32>
    %142 = arith.negf %140 : vector<2x128xf32>
    %143 = math.exp %142 : vector<2x128xf32>
    %cst_63 = arith.constant 1.000000e+00 : f32
    %144 = vector.broadcast %cst_63 : f32 to vector<2x128xf32>
    %145 = arith.addf %144, %143 : vector<2x128xf32>
    %146 = arith.divf %144, %145 : vector<2x128xf32>
    %147 = arith.select %8, %141, %146 : vector<2x128xi1>, vector<2x128xf32>
    %148 = vector.extract_strided_slice %147 {offsets = [0, 0], sizes = [2, 32], strides = [1, 1]} : vector<2x128xf32> to vector<2x32xf32>
    %149 = vector.extract_strided_slice %147 {offsets = [0, 32], sizes = [2, 32], strides = [1, 1]} : vector<2x128xf32> to vector<2x32xf32>
    %150 = vector.extract_strided_slice %147 {offsets = [0, 64], sizes = [2, 32], strides = [1, 1]} : vector<2x128xf32> to vector<2x32xf32>
    %151 = vector.extract_strided_slice %147 {offsets = [0, 96], sizes = [2, 32], strides = [1, 1]} : vector<2x128xf32> to vector<2x32xf32>
    %152 = arith.mulf %149, %134 : vector<2x32xf32>
    %153 = arith.mulf %148, %150 : vector<2x32xf32>
    %154 = arith.addf %152, %153 : vector<2x32xf32>
    %155 = math.tanh %154 : vector<2x32xf32>
    %156 = arith.mulf %151, %155 : vector<2x32xf32>
    %c1_i32_64 = arith.constant 1 : i32
    %c2_i32_65 = arith.constant 2 : i32
    %157 = arith.muli %c1_i32_64, %c2_i32_65 : i32
    %158 = tpu.assume_multiple %157, 2 : i32
    %159 = arith.index_cast %158 : i32 to index
    %c0_66 = arith.constant 0 : index
    %160 = vector.load %arg18[%159, %c0_66] : memref<8x128xf32, #tpu.memory_space<vmem>>, vector<2x128xf32>
    %cst_67 = arith.constant dense<0.000000e+00> : vector<2x128xf32>
    %161 = tpu.matmul %156, %124, %cst_67 {dimension_numbers = #tpu.dot_dimension_numbers<[1], [0], [0], [1], [0, 0, 1, 1], [], []>} : vector<2x32xf32>, vector<32x128xf32>, vector<2x128xf32> -> vector<2x128xf32>
    %162 = arith.addf %160, %161 : vector<2x128xf32>
    %163 = math.tanh %162 : vector<2x128xf32>
    %164 = arith.negf %162 : vector<2x128xf32>
    %165 = math.exp %164 : vector<2x128xf32>
    %cst_68 = arith.constant 1.000000e+00 : f32
    %166 = vector.broadcast %cst_68 : f32 to vector<2x128xf32>
    %167 = arith.addf %166, %165 : vector<2x128xf32>
    %168 = arith.divf %166, %167 : vector<2x128xf32>
    %169 = arith.select %8, %163, %168 : vector<2x128xi1>, vector<2x128xf32>
    %170 = vector.extract_strided_slice %169 {offsets = [0, 0], sizes = [2, 32], strides = [1, 1]} : vector<2x128xf32> to vector<2x32xf32>
    %171 = vector.extract_strided_slice %169 {offsets = [0, 32], sizes = [2, 32], strides = [1, 1]} : vector<2x128xf32> to vector<2x32xf32>
    %172 = vector.extract_strided_slice %169 {offsets = [0, 64], sizes = [2, 32], strides = [1, 1]} : vector<2x128xf32> to vector<2x32xf32>
    %173 = vector.extract_strided_slice %169 {offsets = [0, 96], sizes = [2, 32], strides = [1, 1]} : vector<2x128xf32> to vector<2x32xf32>
    %174 = arith.mulf %171, %154 : vector<2x32xf32>
    %175 = arith.mulf %170, %172 : vector<2x32xf32>
    %176 = arith.addf %174, %175 : vector<2x32xf32>
    %177 = math.tanh %176 : vector<2x32xf32>
    %178 = arith.mulf %173, %177 : vector<2x32xf32>
    %c2_i32_69 = arith.constant 2 : i32
    %c2_i32_70 = arith.constant 2 : i32
    %179 = arith.muli %c2_i32_69, %c2_i32_70 : i32
    %180 = tpu.assume_multiple %179, 2 : i32
    %181 = arith.index_cast %180 : i32 to index
    %c0_71 = arith.constant 0 : index
    %182 = vector.load %arg18[%181, %c0_71] : memref<8x128xf32, #tpu.memory_space<vmem>>, vector<2x128xf32>
    %cst_72 = arith.constant dense<0.000000e+00> : vector<2x128xf32>
    %183 = tpu.matmul %178, %124, %cst_72 {dimension_numbers = #tpu.dot_dimension_numbers<[1], [0], [0], [1], [0, 0, 1, 1], [], []>} : vector<2x32xf32>, vector<32x128xf32>, vector<2x128xf32> -> vector<2x128xf32>
    %184 = arith.addf %182, %183 : vector<2x128xf32>
    %185 = math.tanh %184 : vector<2x128xf32>
    %186 = arith.negf %184 : vector<2x128xf32>
    %187 = math.exp %186 : vector<2x128xf32>
    %cst_73 = arith.constant 1.000000e+00 : f32
    %188 = vector.broadcast %cst_73 : f32 to vector<2x128xf32>
    %189 = arith.addf %188, %187 : vector<2x128xf32>
    %190 = arith.divf %188, %189 : vector<2x128xf32>
    %191 = arith.select %8, %185, %190 : vector<2x128xi1>, vector<2x128xf32>
    %192 = vector.extract_strided_slice %191 {offsets = [0, 0], sizes = [2, 32], strides = [1, 1]} : vector<2x128xf32> to vector<2x32xf32>
    %193 = vector.extract_strided_slice %191 {offsets = [0, 32], sizes = [2, 32], strides = [1, 1]} : vector<2x128xf32> to vector<2x32xf32>
    %194 = vector.extract_strided_slice %191 {offsets = [0, 64], sizes = [2, 32], strides = [1, 1]} : vector<2x128xf32> to vector<2x32xf32>
    %195 = vector.extract_strided_slice %191 {offsets = [0, 96], sizes = [2, 32], strides = [1, 1]} : vector<2x128xf32> to vector<2x32xf32>
    %196 = arith.mulf %193, %176 : vector<2x32xf32>
    %197 = arith.mulf %192, %194 : vector<2x32xf32>
    %198 = arith.addf %196, %197 : vector<2x32xf32>
    %199 = math.tanh %198 : vector<2x32xf32>
    %200 = arith.mulf %195, %199 : vector<2x32xf32>
    %c3_i32_74 = arith.constant 3 : i32
    %c2_i32_75 = arith.constant 2 : i32
    %201 = arith.muli %c3_i32_74, %c2_i32_75 : i32
    %202 = tpu.assume_multiple %201, 2 : i32
    %203 = arith.index_cast %202 : i32 to index
    %c0_76 = arith.constant 0 : index
    %204 = vector.load %arg18[%203, %c0_76] : memref<8x128xf32, #tpu.memory_space<vmem>>, vector<2x128xf32>
    %cst_77 = arith.constant dense<0.000000e+00> : vector<2x128xf32>
    %205 = tpu.matmul %200, %124, %cst_77 {dimension_numbers = #tpu.dot_dimension_numbers<[1], [0], [0], [1], [0, 0, 1, 1], [], []>} : vector<2x32xf32>, vector<32x128xf32>, vector<2x128xf32> -> vector<2x128xf32>
    %206 = arith.addf %204, %205 : vector<2x128xf32>
    %207 = math.tanh %206 : vector<2x128xf32>
    %208 = arith.negf %206 : vector<2x128xf32>
    %209 = math.exp %208 : vector<2x128xf32>
    %cst_78 = arith.constant 1.000000e+00 : f32
    %210 = vector.broadcast %cst_78 : f32 to vector<2x128xf32>
    %211 = arith.addf %210, %209 : vector<2x128xf32>
    %212 = arith.divf %210, %211 : vector<2x128xf32>
    %213 = arith.select %8, %207, %212 : vector<2x128xi1>, vector<2x128xf32>
    %214 = vector.extract_strided_slice %213 {offsets = [0, 0], sizes = [2, 32], strides = [1, 1]} : vector<2x128xf32> to vector<2x32xf32>
    %215 = vector.extract_strided_slice %213 {offsets = [0, 32], sizes = [2, 32], strides = [1, 1]} : vector<2x128xf32> to vector<2x32xf32>
    %216 = vector.extract_strided_slice %213 {offsets = [0, 64], sizes = [2, 32], strides = [1, 1]} : vector<2x128xf32> to vector<2x32xf32>
    %217 = vector.extract_strided_slice %213 {offsets = [0, 96], sizes = [2, 32], strides = [1, 1]} : vector<2x128xf32> to vector<2x32xf32>
    %218 = arith.mulf %215, %198 : vector<2x32xf32>
    %219 = arith.mulf %214, %216 : vector<2x32xf32>
    %220 = arith.addf %218, %219 : vector<2x32xf32>
    %221 = math.tanh %220 : vector<2x32xf32>
    %222 = arith.mulf %217, %221 : vector<2x32xf32>
    %c4_i32_79 = arith.constant 4 : i32
    %c1_80 = arith.constant 1 : index
    %c0_81 = arith.constant 0 : index
    %c0_82 = arith.constant 0 : index
    %223 = vector.load %arg15[%c1_80, %c0_81, %c0_82] : memref<2x2x32xf32, #tpu.memory_space<vmem>>, vector<1x2x32xf32>
    %224 = vector.shape_cast %223 : vector<1x2x32xf32> to vector<2x32xf32>
    %225 = vector.shape_cast %222 : vector<2x32xf32> to vector<1x2x32xf32>
    tpu.vector_store %arg15[%c1_80, %c0_81, %c0_82], %225 {strides = array<i32>} : memref<2x2x32xf32, #tpu.memory_space<vmem>>, vector<1x2x32xf32>,
    %c1_83 = arith.constant 1 : index
    %c0_84 = arith.constant 0 : index
    %c0_85 = arith.constant 0 : index
    %226 = vector.load %arg16[%c1_83, %c0_84, %c0_85] : memref<2x2x32xf32, #tpu.memory_space<vmem>>, vector<1x2x32xf32>
    %227 = vector.shape_cast %226 : vector<1x2x32xf32> to vector<2x32xf32>
    %228 = vector.shape_cast %220 : vector<2x32xf32> to vector<1x2x32xf32>
    tpu.vector_store %arg16[%c1_83, %c0_84, %c0_85], %228 {strides = array<i32>} : memref<2x2x32xf32, #tpu.memory_space<vmem>>, vector<1x2x32xf32>,
    %c1_i32_86 = arith.constant 1 : i32
    %229 = arith.cmpi eq, %arg0, %c1_i32_86 : i32
    %230 = arith.extui %229 : i1 to i32
    %c0_i32_87 = arith.constant 0 : i32
    %231 = arith.cmpi ne, %230, %c0_i32_87 : i32
    scf.if %231 {
      %c0_88 = arith.constant 0 : index
      %c0_89 = arith.constant 0 : index
      %232 = vector.load %arg10[%c0_88, %c0_89] : memref<32x5xf32, #tpu.memory_space<vmem>>, vector<32x5xf32>
      %c0_90 = arith.constant 0 : index
      %c0_91 = arith.constant 0 : index
      %233 = vector.load %arg11[%c0_90, %c0_91] : memref<1x5xf32, #tpu.memory_space<vmem>>, vector<1x5xf32>
      %c1_92 = arith.constant 1 : index
      %c0_93 = arith.constant 0 : index
      %c0_94 = arith.constant 0 : index
      %234 = vector.load %arg15[%c1_92, %c0_93, %c0_94] : memref<2x2x32xf32, #tpu.memory_space<vmem>>, vector<1x2x32xf32>
      %235 = vector.shape_cast %234 : vector<1x2x32xf32> to vector<2x32xf32>
      %cst_95 = arith.constant dense<0.000000e+00> : vector<2x5xf32>
      %236 = tpu.matmul %235, %232, %cst_95 {dimension_numbers = #tpu.dot_dimension_numbers<[1], [0], [0], [1], [0, 0, 1, 1], [], []>} : vector<2x32xf32>, vector<32x5xf32>, vector<2x5xf32> -> vector<2x5xf32>
      %237 = vector.broadcast %233 : vector<1x5xf32> to vector<2x5xf32>
      %238 = arith.addf %236, %237 : vector<2x5xf32>
      %cst_96 = arith.constant dense<0xFF800000> : vector<2xf32>
      %239 = vector.multi_reduction <maximumf>, %238, %cst_96 [1] : vector<2x5xf32> to vector<2xf32>
      %240 = vector.shape_cast %239 : vector<2xf32> to vector<2x1xf32>
      %241 = vector.broadcast %240 : vector<2x1xf32> to vector<2x5xf32>
      %242 = arith.subf %238, %241 : vector<2x5xf32>
      %243 = math.exp %242 : vector<2x5xf32>
      %cst_97 = arith.constant dense<0.000000e+00> : vector<2xf32>
      %244 = vector.multi_reduction <add>, %243, %cst_97 [1] : vector<2x5xf32> to vector<2xf32>
      %245 = vector.shape_cast %244 : vector<2xf32> to vector<2x1xf32>
      %246 = math.log %245 : vector<2x1xf32>
      %247 = vector.broadcast %246 : vector<2x1xf32> to vector<2x5xf32>
      %248 = arith.subf %242, %247 : vector<2x5xf32>
      %c0_98 = arith.constant 0 : index
      %c0_99 = arith.constant 0 : index
      %249 = vector.load %arg12[%c0_98, %c0_99] : memref<2x5xf32, #tpu.memory_space<vmem>>, vector<2x5xf32>
      tpu.vector_store %arg12[%c0_98, %c0_99], %248 {strides = array<i32>} : memref<2x5xf32, #tpu.memory_space<vmem>>, vector<2x5xf32>,
      %c0_100 = arith.constant 0 : index
      %c0_101 = arith.constant 0 : index
      %c0_102 = arith.constant 0 : index
      %250 = vector.load %arg15[%c0_100, %c0_101, %c0_102] : memref<2x2x32xf32, #tpu.memory_space<vmem>>, vector<2x2x32xf32>
      %c0_103 = arith.constant 0 : index
      %c0_104 = arith.constant 0 : index
      %c0_105 = arith.constant 0 : index
      %251 = vector.load %arg13[%c0_103, %c0_104, %c0_105] : memref<2x2x32xf32, #tpu.memory_space<vmem>>, vector<2x2x32xf32>
      tpu.vector_store %arg13[%c0_103, %c0_104, %c0_105], %250 {strides = array<i32>} : memref<2x2x32xf32, #tpu.memory_space<vmem>>, vector<2x2x32xf32>,
      %c0_106 = arith.constant 0 : index
      %c0_107 = arith.constant 0 : index
      %c0_108 = arith.constant 0 : index
      %252 = vector.load %arg16[%c0_106, %c0_107, %c0_108] : memref<2x2x32xf32, #tpu.memory_space<vmem>>, vector<2x2x32xf32>
      %c0_109 = arith.constant 0 : index
      %c0_110 = arith.constant 0 : index
      %c0_111 = arith.constant 0 : index
      %253 = vector.load %arg14[%c0_109, %c0_110, %c0_111] : memref<2x2x32xf32, #tpu.memory_space<vmem>>, vector<2x2x32xf32>
      tpu.vector_store %arg14[%c0_109, %c0_110, %c0_111], %252 {strides = array<i32>} : memref<2x2x32xf32, #tpu.memory_space<vmem>>, vector<2x2x32xf32>,
    } else {
    }
    return
  }
  func.func @transform_0(%arg0: i32) -> (i32, i32) {
    %c0_i32 = arith.constant 0 : i32
    %c0_i32_0 = arith.constant 0 : i32
    return %arg0, %c0_i32 : i32, i32
  }
  func.func @transform_1(%arg0: i32) -> (i32, i32, i32) {
    %c0_i32 = arith.constant 0 : i32
    %c0_i32_0 = arith.constant 0 : i32
    %c0_i32_1 = arith.constant 0 : i32
    %c0_i32_2 = arith.constant 0 : i32
    return %c0_i32, %c0_i32_0, %c0_i32_1 : i32, i32, i32
  }
  func.func @transform_2(%arg0: i32) -> (i32, i32, i32) {
    %c0_i32 = arith.constant 0 : i32
    %c0_i32_0 = arith.constant 0 : i32
    %c0_i32_1 = arith.constant 0 : i32
    %c0_i32_2 = arith.constant 0 : i32
    return %c0_i32, %c0_i32_0, %c0_i32_1 : i32, i32, i32
  }
  func.func @transform_3(%arg0: i32) -> (i32, i32) {
    %c0_i32 = arith.constant 0 : i32
    %c0_i32_0 = arith.constant 0 : i32
    %c0_i32_1 = arith.constant 0 : i32
    return %c0_i32, %c0_i32_0 : i32, i32
  }
  func.func @transform_4(%arg0: i32) -> (i32, i32) {
    %c0_i32 = arith.constant 0 : i32
    %c0_i32_0 = arith.constant 0 : i32
    %c0_i32_1 = arith.constant 0 : i32
    return %c0_i32, %c0_i32_0 : i32, i32
  }
  func.func @transform_5(%arg0: i32) -> (i32, i32) {
    %c0_i32 = arith.constant 0 : i32
    %c0_i32_0 = arith.constant 0 : i32
    %c0_i32_1 = arith.constant 0 : i32
    return %c0_i32, %c0_i32_0 : i32, i32
  }
  func.func @transform_6(%arg0: i32) -> (i32, i32) {
    %c0_i32 = arith.constant 0 : i32
    %c0_i32_0 = arith.constant 0 : i32
    %c0_i32_1 = arith.constant 0 : i32
    return %c0_i32, %c0_i32_0 : i32, i32
  }
  func.func @transform_7(%arg0: i32) -> (i32, i32) {
    %c0_i32 = arith.constant 0 : i32
    %c0_i32_0 = arith.constant 0 : i32
    %c0_i32_1 = arith.constant 0 : i32
    return %c0_i32, %c0_i32_0 : i32, i32
  }
  func.func @transform_8(%arg0: i32) -> (i32, i32) {
    %c0_i32 = arith.constant 0 : i32
    %c0_i32_0 = arith.constant 0 : i32
    %c0_i32_1 = arith.constant 0 : i32
    return %c0_i32, %c0_i32_0 : i32, i32
  }
  func.func @transform_9(%arg0: i32) -> (i32, i32) {
    %c0_i32 = arith.constant 0 : i32
    %c0_i32_0 = arith.constant 0 : i32
    %c0_i32_1 = arith.constant 0 : i32
    return %c0_i32, %c0_i32_0 : i32, i32
  }
  func.func @transform_10(%arg0: i32) -> (i32, i32) {
    %c0_i32 = arith.constant 0 : i32
    %c0_i32_0 = arith.constant 0 : i32
    %c0_i32_1 = arith.constant 0 : i32
    return %c0_i32, %c0_i32_0 : i32, i32
  }
  func.func @transform_11(%arg0: i32) -> (i32, i32) {
    %c0_i32 = arith.constant 0 : i32
    %c0_i32_0 = arith.constant 0 : i32
    %c0_i32_1 = arith.constant 0 : i32
    return %c0_i32, %c0_i32_0 : i32, i32
  }
  func.func @transform_12(%arg0: i32) -> (i32, i32, i32) {
    %c0_i32 = arith.constant 0 : i32
    %c0_i32_0 = arith.constant 0 : i32
    %c0_i32_1 = arith.constant 0 : i32
    %c0_i32_2 = arith.constant 0 : i32
    return %c0_i32, %c0_i32_0, %c0_i32_1 : i32, i32, i32
  }
  func.func @transform_13(%arg0: i32) -> (i32, i32, i32) {
    %c0_i32 = arith.constant 0 : i32
    %c0_i32_0 = arith.constant 0 : i32
    %c0_i32_1 = arith.constant 0 : i32
    %c0_i32_2 = arith.constant 0 : i32
    return %c0_i32, %c0_i32_0, %c0_i32_1 : i32, i32, i32
  }
}

</mosaic_0001>

<llo_original>
// kernel: _lambda_.1
$region0: #{_lambda_.1}
  #allocation0 [shape = 'u32[]', space=smem, size = 0x4, offset = 0x4, fixed_abs, tag = 'smem constant byte address 0x4 - core index']
  #allocation1 [shape = 'u32[144,128]{1,0:T(1,128)}', space=vmem, size = 0x12000, scoped, tag = 'internal scratch']
  #allocation2 [shape = 'f32[2,2,32]{2,1,0:T(2,128)}', space=vmem, size = 0x800, scoped, tag = 'scratch operand']
  #allocation3 [shape = 'f32[2,2,32]{2,1,0:T(2,128)}', space=vmem, size = 0x800, scoped, tag = 'scratch operand']
  #allocation4 [shape = 'f32[8,32]{1,0:T(8,128)}', space=vmem, size = 0x1000, scoped, tag = 'scratch operand']
  #allocation5 [shape = 'f32[8,128]{1,0:T(8,128)}', space=vmem, size = 0x1000, scoped, tag = 'scratch operand']
  %s0 = inlined_call_operand.vmem [shape: f32[16,4], index: 0, kind: input, shape index: {}]
  %s1 = inlined_call_operand.vmem [shape: f32[2,2,32], index: 1, kind: input, shape index: {}]
  %s2 = inlined_call_operand.vmem [shape: f32[2,2,32], index: 2, kind: input, shape index: {}]
  %s3 = inlined_call_operand.hbm [shape: f32[4,128], index: 3, kind: input, shape index: {}]
  %s4 = inlined_call_operand.vmem [shape: f32[32,128], index: 4, kind: input, shape index: {}]
  %s5 = inlined_call_operand.hbm [shape: f32[1,128], index: 5, kind: input, shape index: {}]
  %s6 = inlined_call_operand.vmem [shape: f32[32,128], index: 6, kind: input, shape index: {}]
  %s7 = inlined_call_operand.hbm [shape: f32[32,128], index: 7, kind: input, shape index: {}]
  %s8 = inlined_call_operand.hbm [shape: f32[1,128], index: 8, kind: input, shape index: {}]
  %s9 = inlined_call_operand.vmem [shape: f32[32,5], index: 9, kind: input, shape index: {}]
  %s10 = inlined_call_operand.hbm [shape: f32[1,5], index: 10, kind: input, shape index: {}]
  %s11 = inlined_call_operand.hbm [shape: f32[2,5], index: 11, kind: output, shape index: {0}]
  %s12 = inlined_call_operand.hbm [shape: f32[2,2,32], index: 12, kind: output, shape index: {1}]
  %s13 = inlined_call_operand.hbm [shape: f32[2,2,32], index: 13, kind: output, shape index: {2}]
  %14 = xla_tuple %s11, %s12, %s13
  %s15 = sld [smem:[#allocation0]]
  $region121: #{_lambda_.1} parent=0
    _
  %s17 = ssub.s32 1, %s15
  %s18 = scalar_select 0, %s17, %s15
  $region1: #{_lambda_.1} parent=0
    #allocation6 [shape = 'u8[2048]{0}', space=vmem, size = 0x800, scoped, tag = 'input window, operand 3, single buffered']
    #allocation7 [shape = 's32[2]{0}', space=sflag, size = 0x8, scoped, tag = 'scoped memory for _lambda_.1']
    #allocation8 [shape = 's32[2]{0}', space=sflag, size = 0x8, scoped, tag = 'scoped memory for _lambda_.1']
    #allocation9 [shape = 'u8[512]{0}', space=vmem, size = 0x400, scoped, tag = 'input window, operand 5, single buffered']
    #allocation10 [shape = 's32[1]{0}', space=sflag, size = 0x4, scoped, tag = 'scoped memory for _lambda_.1']
    #allocation11 [shape = 'u8[16384]{0}', space=vmem, size = 0x4000, scoped, tag = 'input window, operand 7, single buffered']
    #allocation12 [shape = 'u8[512]{0}', space=vmem, size = 0x400, scoped, tag = 'input window, operand 8, single buffered']
    #allocation13 [shape = 's32[1]{0}', space=sflag, size = 0x4, scoped, tag = 'scoped memory for _lambda_.1']
    #allocation14 [shape = 'u8[512]{0}', space=vmem, size = 0x400, scoped, tag = 'input window, operand 10, single buffered']
    #allocation15 [shape = 'u8[1024]{0}', space=vmem, size = 0x400, scoped, tag = 'output window, operand 0, single buffered']
    #allocation16 [shape = 'u8[2048]{0}', space=vmem, size = 0x800, scoped, tag = 'output window, operand 1, single buffered']
    #allocation17 [shape = 's32[1]{0}', space=sflag, size = 0x4, scoped, tag = 'scoped memory for _lambda_.1']
    #allocation18 [shape = 'u8[2048]{0}', space=vmem, size = 0x800, scoped, tag = 'output window, operand 2, single buffered']
    %19 = vsyncpa [#allocation7], 0
    %20 = vsyncpa [#allocation10], 0
    %21 = vsyncpa [#allocation13], 0
    %22 = vsyncpa [#allocation8], 0
    %23 = vsyncpa [#allocation17], 0
    loop: start=0, step=1, limit=4
    $region2: #{_lambda_.1} parent=1 // loop_pre_header
      _
    $region3: #{_lambda_.1} parent=1 // loop_header
      %s25 = sphi 0, %s29
      %p26 = scmp.ge.s32.totalorder %s25, 4
      %s35 = sphi 0, %s37
      %s38 = sphi 0, %s35
      %s39 = sphi 0, %s38
      %s55 = sphi 0, %s39
      %s59 = sphi 0, %s59
      %s61 = sphi 0, %s59
      %s62 = sphi 0, %s61
      %s76 = sphi 0, %s62
      %s80 = sphi 0, %s80
      %s82 = sphi 0, %s80
      %s83 = sphi 0, %s82
      %s97 = sphi 0, %s83
      %s101 = sphi 0, %s101
      %s103 = sphi 0, %s101
      %s104 = sphi 0, %s103
      %s118 = sphi 0, %s104
      %s122 = sphi 0, %s122
      %s124 = sphi 0, %s122
      %s125 = sphi 0, %s124
      %s139 = sphi 0, %s125
      %s143 = sphi 0, %s143
      %s145 = sphi 0, %s143
      %s146 = sphi 0, %s145
      %s160 = sphi 0, %s146
      %s164 = sphi 0, %s164
      %s166 = sphi 0, %s164
      %s167 = sphi 0, %s166
      %s181 = sphi 0, %s167
      %s185 = sphi 0, %s185
      %s187 = sphi 0, %s185
      %s188 = sphi 0, %s187
      %s202 = sphi 0, %s188
      %s206 = sphi 0, %s206
      %s208 = sphi 0, %s206
      %s209 = sphi 0, %s208
      %s223 = sphi 0, %s209
      %s227 = sphi 0, %s227
      %s229 = sphi 0, %s227
      %s230 = sphi 0, %s229
      %s244 = sphi 0, %s230
      %s248 = sphi 0, %s248
      %s250 = sphi 0, %s248
      %s251 = sphi 0, %s250
      %s265 = sphi 0, %s251
      %s269 = sphi 0, %s269
      %s271 = sphi 0, %s269
      %s272 = sphi 0, %s271
      %s286 = sphi 0, %s272
      %s290 = sphi 0, %s290
      %s292 = sphi 0, %s290
      %s293 = sphi 0, %s292
      %s307 = sphi 0, %s293
      %s311 = sphi 0, %s311
      %s313 = sphi 0, %s311
      %s314 = sphi 0, %s313
      %s328 = sphi 0, %s314
    $region4: #{_lambda_.1} parent=1 // loop_header_branch
      %28 = sbr.rel (%p26) target = $region8
    $region5: #{_lambda_.1} parent=1 // loop_body
      %s30 = ssub.s32 %s25, 1
      %s31 = ssub.s32 %s25, 2
      %s32 = sadd.s32 %s25, 1
      %s33 = ssub.s32 %s25, %s32
      %p34 = scmp.eq.s32.totalorder %s33, 0
      %s36 = sadd.s32 %s35, 1
      %s37 = scalar_select %p34, %s35, %s36
      %p40 = pneg %p34
      %p41 = scmp.eq.s32.totalorder %s25, 1
      %p42 = por %p40, %p41
      %p43 = scmp.ne.s32.totalorder %s35, %s38
      %p44 = scmp.eq.s32.totalorder %s25, 0
      %p45 = por %p43, %p44
      %p46 = scmp.ne.s32.totalorder %s35, %s38
      %p47 = scmp.eq.s32.totalorder %s30, 1
      %p48 = por %p46, %p47
      %p49 = scmp.ne.s32.totalorder %s38, %s39
      %p50 = scmp.eq.s32.totalorder %s30, 0
      %p51 = por %p49, %p50
      %p52 = scmp.ne.s32.totalorder %s38, %s39
      %p53 = scmp.eq.s32.totalorder %s31, 1
      %p54 = por %p52, %p53
      %p56 = scmp.ne.s32.totalorder %s39, %s55
      %p57 = scmp.eq.s32.totalorder %s31, 0
      %p58 = por %p56, %p57
      %s60 = sadd.s32 %s59, 1
      %p63 = scmp.eq.s32.totalorder %s25, 1
      %p64 = scmp.ne.s32.totalorder %s59, %s61
      %p65 = scmp.eq.s32.totalorder %s25, 0
      %p66 = por %p64, %p65
      %p67 = scmp.ne.s32.totalorder %s59, %s61
      %p68 = scmp.eq.s32.totalorder %s30, 1
      %p69 = por %p67, %p68
      %p70 = scmp.ne.s32.totalorder %s61, %s62
      %p71 = scmp.eq.s32.totalorder %s30, 0
      %p72 = por %p70, %p71
      %p73 = scmp.ne.s32.totalorder %s61, %s62
      %p74 = scmp.eq.s32.totalorder %s31, 1
      %p75 = por %p73, %p74
      %p77 = scmp.ne.s32.totalorder %s62, %s76
      %p78 = scmp.eq.s32.totalorder %s31, 0
      %p79 = por %p77, %p78
      %s81 = sadd.s32 %s80, 1
      %p84 = scmp.eq.s32.totalorder %s25, 1
      %p85 = scmp.ne.s32.totalorder %s80, %s82
      %p86 = scmp.eq.s32.totalorder %s25, 0
      %p87 = por %p85, %p86
      %p88 = scmp.ne.s32.totalorder %s80, %s82
      %p89 = scmp.eq.s32.totalorder %s30, 1
      %p90 = por %p88, %p89
      %p91 = scmp.ne.s32.totalorder %s82, %s83
      %p92 = scmp.eq.s32.totalorder %s30, 0
      %p93 = por %p91, %p92
      %p94 = scmp.ne.s32.totalorder %s82, %s83
      %p95 = scmp.eq.s32.totalorder %s31, 1
      %p96 = por %p94, %p95
      %p98 = scmp.ne.s32.totalorder %s83, %s97
      %p99 = scmp.eq.s32.totalorder %s31, 0
      %p100 = por %p98, %p99
      %s102 = sadd.s32 %s101, 1
      %p105 = scmp.eq.s32.totalorder %s25, 1
      %p106 = scmp.ne.s32.totalorder %s101, %s103
      %p107 = scmp.eq.s32.totalorder %s25, 0
      %p108 = por %p106, %p107
      %p109 = scmp.ne.s32.totalorder %s101, %s103
      %p110 = scmp.eq.s32.totalorder %s30, 1
      %p111 = por %p109, %p110
      %p112 = scmp.ne.s32.totalorder %s103, %s104
      %p113 = scmp.eq.s32.totalorder %s30, 0
      %p114 = por %p112, %p113
      %p115 = scmp.ne.s32.totalorder %s103, %s104
      %p116 = scmp.eq.s32.totalorder %s31, 1
      %p117 = por %p115, %p116
      %p119 = scmp.ne.s32.totalorder %s104, %s118
      %p120 = scmp.eq.s32.totalorder %s31, 0
      %p121 = por %p119, %p120
      %s123 = sadd.s32 %s122, 1
      %p126 = scmp.eq.s32.totalorder %s25, 1
      %p127 = scmp.ne.s32.totalorder %s122, %s124
      %p128 = scmp.eq.s32.totalorder %s25, 0
      %p129 = por %p127, %p128
      %p130 = scmp.ne.s32.totalorder %s122, %s124
      %p131 = scmp.eq.s32.totalorder %s30, 1
      %p132 = por %p130, %p131
      %p133 = scmp.ne.s32.totalorder %s124, %s125
      %p134 = scmp.eq.s32.totalorder %s30, 0
      %p135 = por %p133, %p134
      %p136 = scmp.ne.s32.totalorder %s124, %s125
      %p137 = scmp.eq.s32.totalorder %s31, 1
      %p138 = por %p136, %p137
      %p140 = scmp.ne.s32.totalorder %s125, %s139
      %p141 = scmp.eq.s32.totalorder %s31, 0
      %p142 = por %p140, %p141
      %s144 = sadd.s32 %s143, 1
      %p147 = scmp.eq.s32.totalorder %s25, 1
      %p148 = scmp.ne.s32.totalorder %s143, %s145
      %p149 = scmp.eq.s32.totalorder %s25, 0
      %p150 = por %p148, %p149
      %p151 = scmp.ne.s32.totalorder %s143, %s145
      %p152 = scmp.eq.s32.totalorder %s30, 1
      %p153 = por %p151, %p152
      %p154 = scmp.ne.s32.totalorder %s145, %s146
      %p155 = scmp.eq.s32.totalorder %s30, 0
      %p156 = por %p154, %p155
      %p157 = scmp.ne.s32.totalorder %s145, %s146
      %p158 = scmp.eq.s32.totalorder %s31, 1
      %p159 = por %p157, %p158
      %p161 = scmp.ne.s32.totalorder %s146, %s160
      %p162 = scmp.eq.s32.totalorder %s31, 0
      %p163 = por %p161, %p162
      %s165 = sadd.s32 %s164, 1
      %p168 = scmp.eq.s32.totalorder %s25, 1
      %p169 = scmp.ne.s32.totalorder %s164, %s166
      %p170 = scmp.eq.s32.totalorder %s25, 0
      %p171 = por %p169, %p170
      %p172 = scmp.ne.s32.totalorder %s164, %s166
      %p173 = scmp.eq.s32.totalorder %s30, 1
      %p174 = por %p172, %p173
      %p175 = scmp.ne.s32.totalorder %s166, %s167
      %p176 = scmp.eq.s32.totalorder %s30, 0
      %p177 = por %p175, %p176
      %p178 = scmp.ne.s32.totalorder %s166, %s167
      %p179 = scmp.eq.s32.totalorder %s31, 1
      %p180 = por %p178, %p179
      %p182 = scmp.ne.s32.totalorder %s167, %s181
      %p183 = scmp.eq.s32.totalorder %s31, 0
      %p184 = por %p182, %p183
      %s186 = sadd.s32 %s185, 1
      %p189 = scmp.eq.s32.totalorder %s25, 1
      %p190 = scmp.ne.s32.totalorder %s185, %s187
      %p191 = scmp.eq.s32.totalorder %s25, 0
      %p192 = por %p190, %p191
      %p193 = scmp.ne.s32.totalorder %s185, %s187
      %p194 = scmp.eq.s32.totalorder %s30, 1
      %p195 = por %p193, %p194
      %p196 = scmp.ne.s32.totalorder %s187, %s188
      %p197 = scmp.eq.s32.totalorder %s30, 0
      %p198 = por %p196, %p197
      %p199 = scmp.ne.s32.totalorder %s187, %s188
      %p200 = scmp.eq.s32.totalorder %s31, 1
      %p201 = por %p199, %p200
      %p203 = scmp.ne.s32.totalorder %s188, %s202
      %p204 = scmp.eq.s32.totalorder %s31, 0
      %p205 = por %p203, %p204
      %s207 = sadd.s32 %s206, 1
      %p210 = scmp.eq.s32.totalorder %s25, 1
      %p211 = scmp.ne.s32.totalorder %s206, %s208
      %p212 = scmp.eq.s32.totalorder %s25, 0
      %p213 = por %p211, %p212
      %p214 = scmp.ne.s32.totalorder %s206, %s208
      %p215 = scmp.eq.s32.totalorder %s30, 1
      %p216 = por %p214, %p215
      %p217 = scmp.ne.s32.totalorder %s208, %s209
      %p218 = scmp.eq.s32.totalorder %s30, 0
      %p219 = por %p217, %p218
      %p220 = scmp.ne.s32.totalorder %s208, %s209
      %p221 = scmp.eq.s32.totalorder %s31, 1
      %p222 = por %p220, %p221
      %p224 = scmp.ne.s32.totalorder %s209, %s223
      %p225 = scmp.eq.s32.totalorder %s31, 0
      %p226 = por %p224, %p225
      %s228 = sadd.s32 %s227, 1
      %p231 = scmp.eq.s32.totalorder %s25, 1
      %p232 = scmp.ne.s32.totalorder %s227, %s229
      %p233 = scmp.eq.s32.totalorder %s25, 0
      %p234 = por %p232, %p233
      %p235 = scmp.ne.s32.totalorder %s227, %s229
      %p236 = scmp.eq.s32.totalorder %s30, 1
      %p237 = por %p235, %p236
      %p238 = scmp.ne.s32.totalorder %s229, %s230
      %p239 = scmp.eq.s32.totalorder %s30, 0
      %p240 = por %p238, %p239
      %p241 = scmp.ne.s32.totalorder %s229, %s230
      %p242 = scmp.eq.s32.totalorder %s31, 1
      %p243 = por %p241, %p242
      %p245 = scmp.ne.s32.totalorder %s230, %s244
      %p246 = scmp.eq.s32.totalorder %s31, 0
      %p247 = por %p245, %p246
      %s249 = sadd.s32 %s248, 1
      %p252 = scmp.eq.s32.totalorder %s25, 1
      %p253 = scmp.ne.s32.totalorder %s248, %s250
      %p254 = scmp.eq.s32.totalorder %s25, 0
      %p255 = por %p253, %p254
      %p256 = scmp.ne.s32.totalorder %s248, %s250
      %p257 = scmp.eq.s32.totalorder %s30, 1
      %p258 = por %p256, %p257
      %p259 = scmp.ne.s32.totalorder %s250, %s251
      %p260 = scmp.eq.s32.totalorder %s30, 0
      %p261 = por %p259, %p260
      %p262 = scmp.ne.s32.totalorder %s250, %s251
      %p263 = scmp.eq.s32.totalorder %s31, 1
      %p264 = por %p262, %p263
      %p266 = scmp.ne.s32.totalorder %s251, %s265
      %p267 = scmp.eq.s32.totalorder %s31, 0
      %p268 = por %p266, %p267
      %s270 = sadd.s32 %s269, 1
      %p273 = scmp.eq.s32.totalorder %s25, 1
      %p274 = scmp.ne.s32.totalorder %s269, %s271
      %p275 = scmp.eq.s32.totalorder %s25, 0
      %p276 = por %p274, %p275
      %p277 = scmp.ne.s32.totalorder %s269, %s271
      %p278 = scmp.eq.s32.totalorder %s30, 1
      %p279 = por %p277, %p278
      %p280 = scmp.ne.s32.totalorder %s271, %s272
      %p281 = scmp.eq.s32.totalorder %s30, 0
      %p282 = por %p280, %p281
      %p283 = scmp.ne.s32.totalorder %s271, %s272
      %p284 = scmp.eq.s32.totalorder %s31, 1
      %p285 = por %p283, %p284
      %p287 = scmp.ne.s32.totalorder %s272, %s286
      %p288 = scmp.eq.s32.totalorder %s31, 0
      %p289 = por %p287, %p288
      %s291 = sadd.s32 %s290, 1
      %p294 = scmp.eq.s32.totalorder %s25, 1
      %p295 = scmp.ne.s32.totalorder %s290, %s292
      %p296 = scmp.eq.s32.totalorder %s25, 0
      %p297 = por %p295, %p296
      %p298 = scmp.ne.s32.totalorder %s290, %s292
      %p299 = scmp.eq.s32.totalorder %s30, 1
      %p300 = por %p298, %p299
      %p301 = scmp.ne.s32.totalorder %s292, %s293
      %p302 = scmp.eq.s32.totalorder %s30, 0
      %p303 = por %p301, %p302
      %p304 = scmp.ne.s32.totalorder %s292, %s293
      %p305 = scmp.eq.s32.totalorder %s31, 1
      %p306 = por %p304, %p305
      %p308 = scmp.ne.s32.totalorder %s293, %s307
      %p309 = scmp.eq.s32.totalorder %s31, 0
      %p310 = por %p308, %p309
      %s312 = sadd.s32 %s311, 1
      %p315 = scmp.eq.s32.totalorder %s25, 1
      %p316 = scmp.ne.s32.totalorder %s311, %s313
      %p317 = scmp.eq.s32.totalorder %s25, 0
      %p318 = por %p316, %p317
      %p319 = scmp.ne.s32.totalorder %s311, %s313
      %p320 = scmp.eq.s32.totalorder %s30, 1
      %p321 = por %p319, %p320
      %p322 = scmp.ne.s32.totalorder %s313, %s314
      %p323 = scmp.eq.s32.totalorder %s30, 0
      %p324 = por %p322, %p323
      %p325 = scmp.ne.s32.totalorder %s313, %s314
      %p326 = scmp.eq.s32.totalorder %s31, 1
      %p327 = por %p325, %p326
      %p329 = scmp.ne.s32.totalorder %s314, %s328
      %p330 = scmp.eq.s32.totalorder %s31, 0
      %p331 = por %p329, %p330
      %p332 = scmp.le.s32.totalorder 1, %s25
      %p333 = scmp.lt.s32.totalorder %s25, 3
      %p334 = pnand %p332, %p333
      %p335 = pneg %p334
      // Predicated region
      $region9: #{_lambda_.1} parent=5 // pred_check
        _
      $region10: #{_lambda_.1} parent=5 // pred_check_branch
        %337 = sbr.rel (%p334) target = $region12
      $region11: #{_lambda_.1} parent=5 // pred_region
        %s338 = ssub.s32 %s25, 1
        // Predicated region
        $region13: #{_lambda_.1} parent=11 // pred_check
          %p339 = pneg %p72
        $region14: #{_lambda_.1} parent=11 // pred_check_branch
          %341 = sbr.rel (%p339) target = $region16
        $region15: #{_lambda_.1} parent=11 // pred_region
          _
        $region16: #{_lambda_.1} parent=11 // pred_fallthru
          _
        // Predicated region
        $region17: #{_lambda_.1} parent=11 // pred_check
          %p342 = pneg %p93
        $region18: #{_lambda_.1} parent=11 // pred_check_branch
          %344 = sbr.rel (%p342) target = $region20
        $region19: #{_lambda_.1} parent=11 // pred_region
          _
        $region20: #{_lambda_.1} parent=11 // pred_fallthru
          _
        // Predicated region
        $region21: #{_lambda_.1} parent=11 // pred_check
          %p345 = pneg %p114
        $region22: #{_lambda_.1} parent=11 // pred_check_branch
          %347 = sbr.rel (%p345) target = $region24
        $region23: #{_lambda_.1} parent=11 // pred_region
          %s349 = ssub.s32 64, 64
          %350 = vsyncadd [#allocation7], %s349
          %s352 = sshll.u32 [#allocation6], 4
          %s353 = int_to_ptr.vmem [resolvable:$true] %s352
          %355 = dma.hbm_to_vmem [thread:$0]  %s3, 64, %s353, [#allocation7]
        $region24: #{_lambda_.1} parent=11 // pred_fallthru
          _
        // Predicated region
        $region25: #{_lambda_.1} parent=11 // pred_check
          %p356 = pneg %p135
        $region26: #{_lambda_.1} parent=11 // pred_check_branch
          %358 = sbr.rel (%p356) target = $region28
        $region27: #{_lambda_.1} parent=11 // pred_region
          _
        $region28: #{_lambda_.1} parent=11 // pred_fallthru
          _
        // Predicated region
        $region29: #{_lambda_.1} parent=11 // pred_check
          %p359 = pneg %p156
        $region30: #{_lambda_.1} parent=11 // pred_check_branch
          %361 = sbr.rel (%p359) target = $region32
        $region31: #{_lambda_.1} parent=11 // pred_region
          %s363 = ssub.s32 16, 16
          %364 = vsyncadd [#allocation10], %s363
          %s366 = sshll.u32 [#allocation9], 4
          %s367 = int_to_ptr.vmem [resolvable:$true] %s366
          %369 = dma.hbm_to_vmem [thread:$0]  %s5, 16, %s367, [#allocation10]
        $region32: #{_lambda_.1} parent=11 // pred_fallthru
          _
        // Predicated region
        $region33: #{_lambda_.1} parent=11 // pred_check
          %p370 = pneg %p177
        $region34: #{_lambda_.1} parent=11 // pred_check_branch
          %372 = sbr.rel (%p370) target = $region36
        $region35: #{_lambda_.1} parent=11 // pred_region
          _
        $region36: #{_lambda_.1} parent=11 // pred_fallthru
          _
        // Predicated region
        $region37: #{_lambda_.1} parent=11 // pred_check
          %p373 = pneg %p198
        $region38: #{_lambda_.1} parent=11 // pred_check_branch
          %375 = sbr.rel (%p373) target = $region40
        $region39: #{_lambda_.1} parent=11 // pred_region
          %s377 = ssub.s32 512, 512
          %378 = vsyncadd [#allocation10], %s377
          %s379 = sshll.u32 [#allocation11], 4
          %s380 = int_to_ptr.vmem [resolvable:$true] %s379
          %385 = dma.hbm_to_vmem [thread:$0]  %s7, 512, %s380, [#allocation10], 128, 128, 8
        $region40: #{_lambda_.1} parent=11 // pred_fallthru
          _
        // Predicated region
        $region41: #{_lambda_.1} parent=11 // pred_check
          %p386 = pneg %p219
        $region42: #{_lambda_.1} parent=11 // pred_check_branch
          %388 = sbr.rel (%p386) target = $region44
        $region43: #{_lambda_.1} parent=11 // pred_region
          %s390 = ssub.s32 16, 16
          %391 = vsyncadd [#allocation13], %s390
          %s393 = sshll.u32 [#allocation12], 4
          %s394 = int_to_ptr.vmem [resolvable:$true] %s393
          %396 = dma.hbm_to_vmem [thread:$0]  %s8, 16, %s394, [#allocation13]
        $region44: #{_lambda_.1} parent=11 // pred_fallthru
          _
        // Predicated region
        $region45: #{_lambda_.1} parent=11 // pred_check
          %p397 = pneg %p240
        $region46: #{_lambda_.1} parent=11 // pred_check_branch
          %399 = sbr.rel (%p397) target = $region48
        $region47: #{_lambda_.1} parent=11 // pred_region
          _
        $region48: #{_lambda_.1} parent=11 // pred_fallthru
          _
        // Predicated region
        $region49: #{_lambda_.1} parent=11 // pred_check
          %p400 = pneg %p261
        $region50: #{_lambda_.1} parent=11 // pred_check_branch
          %402 = sbr.rel (%p400) target = $region52
        $region51: #{_lambda_.1} parent=11 // pred_region
          %s404 = ssub.s32 16, 16
          %405 = vsyncadd [#allocation13], %s404
          %s407 = sshll.u32 [#allocation14], 4
          %s408 = int_to_ptr.vmem [resolvable:$true] %s407
          %410 = dma.hbm_to_vmem [thread:$0]  %s10, 16, %s408, [#allocation13]
        $region52: #{_lambda_.1} parent=11 // pred_fallthru
          _
      $region12: #{_lambda_.1} parent=5 // pred_fallthru
        _
      %p411 = scmp.lt.s32.totalorder %s25, 2
      // Predicated region
      $region53: #{_lambda_.1} parent=5 // pred_check
        %p412 = pneg %p411
      $region54: #{_lambda_.1} parent=5 // pred_check_branch
        %414 = sbr.rel (%p412) target = $region56
      $region55: #{_lambda_.1} parent=5 // pred_region
        // Predicated region
        $region57: #{_lambda_.1} parent=55 // pred_check
          %p415 = pneg %p45
        $region58: #{_lambda_.1} parent=55 // pred_check_branch
          %417 = sbr.rel (%p415) target = $region60
        $region59: #{_lambda_.1} parent=55 // pred_region
          %p418 = scmp.lt.s32.totalorder %s25, 1
          %s419 = scalar_select %p418, %s25, 1
          %s420 = smul.addr %s419, 8
          %s421 = scalar_lea.vmem %s0, %s420
        $region60: #{_lambda_.1} parent=55 // pred_fallthru
          _
      $region56: #{_lambda_.1} parent=5 // pred_fallthru
        _
      %p422 = scmp.le.s32.totalorder 1, %s25
      %p423 = scmp.lt.s32.totalorder %s25, 3
      %p424 = pnand %p422, %p423
      %p425 = pneg %p424
      // Predicated region
      $region61: #{_lambda_.1} parent=5 // pred_check
        _
      $region62: #{_lambda_.1} parent=5 // pred_check_branch
        %427 = sbr.rel (%p424) target = $region64
      $region63: #{_lambda_.1} parent=5 // pred_region
        %s428 = ssub.s32 %s25, 1
        // Predicated region
        $region65: #{_lambda_.1} parent=63 // pred_check
          %p429 = pneg %p114
        $region66: #{_lambda_.1} parent=63 // pred_check_branch
          %431 = sbr.rel (%p429) target = $region68
        $region67: #{_lambda_.1} parent=63 // pred_region
          %432 = dma.done [#allocation7], 64
        $region68: #{_lambda_.1} parent=63 // pred_fallthru
          _
        // Predicated region
        $region69: #{_lambda_.1} parent=63 // pred_check
          %p433 = pneg %p156
        $region70: #{_lambda_.1} parent=63 // pred_check_branch
          %435 = sbr.rel (%p433) target = $region72
        $region71: #{_lambda_.1} parent=63 // pred_region
          %436 = dma.done [#allocation10], 16
        $region72: #{_lambda_.1} parent=63 // pred_fallthru
          _
        // Predicated region
        $region73: #{_lambda_.1} parent=63 // pred_check
          %p437 = pneg %p198
        $region74: #{_lambda_.1} parent=63 // pred_check_branch
          %439 = sbr.rel (%p437) target = $region76
        $region75: #{_lambda_.1} parent=63 // pred_region
          %440 = dma.done [#allocation10], 512
        $region76: #{_lambda_.1} parent=63 // pred_fallthru
          _
        // Predicated region
        $region77: #{_lambda_.1} parent=63 // pred_check
          %p441 = pneg %p219
        $region78: #{_lambda_.1} parent=63 // pred_check_branch
          %443 = sbr.rel (%p441) target = $region80
        $region79: #{_lambda_.1} parent=63 // pred_region
          %444 = dma.done [#allocation13], 16
        $region80: #{_lambda_.1} parent=63 // pred_fallthru
          _
        // Predicated region
        $region81: #{_lambda_.1} parent=63 // pred_check
          %p445 = pneg %p261
        $region82: #{_lambda_.1} parent=63 // pred_check_branch
          %447 = sbr.rel (%p445) target = $region84
        $region83: #{_lambda_.1} parent=63 // pred_region
          %448 = dma.done [#allocation13], 16
        $region84: #{_lambda_.1} parent=63 // pred_fallthru
          _
        %p449 = scmp.lt.s32.totalorder %s30, 1
        %s450 = scalar_select %p449, %s30, 1
        %s451 = smul.addr %s450, 8
        %s452 = scalar_lea.vmem %s0, %s451
        %p453 = pneg %p51
        %p454 = pneg %p48
        %p455 = pneg %p72
        %p456 = pneg %p69
        %p457 = pneg %p93
        %p458 = pneg %p90
        %p459 = pneg %p114
        %p460 = pneg %p111
        %p461 = pneg %p135
        %p462 = pneg %p132
        %p463 = pneg %p156
        %p464 = pneg %p153
        %p465 = pneg %p177
        %p466 = pneg %p174
        %p467 = pneg %p198
        %p468 = pneg %p195
        %p469 = pneg %p219
        %p470 = pneg %p216
        %p471 = pneg %p240
        %p472 = pneg %p237
        %p473 = pneg %p261
        %p474 = pneg %p258
        %p475 = pneg %p282
        %p476 = pneg %p279
        %p477 = pneg %p303
        %p478 = pneg %p300
        %p479 = pneg %p324
        %p480 = pneg %p321
        %p481 = scmp.lt.s32.totalorder %s30, 1
        %s482 = scalar_select %p481, %s30, 1
        %s483 = smul.addr %s482, 8
        %s484 = scalar_lea.vmem %s0, %s483
        %p485 = scmp.eq.s32.totalorder %s30, 0
        // Predicated region
        $region85: #{_lambda_.1} parent=63 // pred_check
          %p486 = pneg %p485
        $region86: #{_lambda_.1} parent=63 // pred_check_branch
          %488 = sbr.rel (%p486) target = $region88
        $region87: #{_lambda_.1} parent=63 // pred_region
          %v489 = vld [vmem:[%s1] sm:$0x3]
          %v490 = vld [vmem:[%s1 + $0x2] sm:$0x3]
          %vm491 = vcmask 254976
          %492 = vst.msk [vmem:[#allocation2] sm:$0x3] %vm491, %v489
          %493 = vst.msk [vmem:[#allocation2 + $0x2] sm:$0x3] %vm491, %v490
          %v494 = vld [vmem:[%s2] sm:$0x3]
          %v495 = vld [vmem:[%s2 + $0x2] sm:$0x3]
          %496 = vst.msk [vmem:[#allocation3] sm:$0x3] %vm491, %v494
          %497 = vst.msk [vmem:[#allocation3 + $0x2] sm:$0x3] %vm491, %v495
        $region88: #{_lambda_.1} parent=63 // pred_fallthru
          _
        %v498 = vlaneseq
        %v499 = vand.u32 %v498, 127
        %vm500 = vcmp.ge.s32.totalorder %v499, 64
        %vm501 = vcmp.lt.s32.totalorder %v499, 96
        %vm502 = vmand %vm500, %vm501
        %v503 = vld [vmem:[#allocation6] sm:$0xf]
        %v504 = vld [vmem:[%s4] sm:$0xff]
        %v505 = vld [vmem:[%s4 + $0x8] sm:$0xff]
        %v506 = vld [vmem:[%s4 + $0x10] sm:$0xff]
        %v507 = vld [vmem:[%s4 + $0x18] sm:$0xff]
        %v508 = vld [vmem:[#allocation9] sm:$0x1]
        %v509 = vld [vmem:[%s484] sm:$0xff]
        %v511 = vlaneseq
        %v512 = vshrl.u32 %v511, 7
        %v513 = vsub.s32 0, %v512
        %v514 = vrot.slane %v508, %v513
        %vm516 = vcmask 31744
        %v518 = vsel %vm516, %v509, 0
        %vm520 = vcmask 1043456
        %v522 = vsel %vm520, %v503, 0
        %524 = vmatprep.subr.mxu0 0.0
        %525 = vmatpush1.msra.mxu0 0.0
        %526 = vmatprep.subr.mxu0 0.0
        %527 = vmatpush1.msra.mxu0 0.0
        %528 = vmatprep.subr.mxu0 0.0
        %529 = vmatpush1.msra.mxu0 0.0
        %530 = vmatprep.subr.mxu0 0.0
        %531 = vmatpush1.msra.mxu0 0.0
        %532 = vmatprep.subr.mxu0 0.0
        %533 = vmatpush1.msra.mxu0 0.0
        %534 = vmatprep.subr.mxu0 0.0
        %535 = vmatpush1.msra.mxu0 0.0
        %536 = vmatprep.subr.mxu0 0.0
        %537 = vmatpush1.msra.mxu0 0.0
        %538 = vmatprep.subr.mxu0 0.0
        %539 = vmatpush1.msra.mxu0 0.0
        %540 = vmatprep.subr.mxu0 0.0
        %541 = vmatpush1.msra.mxu0 0.0
        %542 = vmatprep.subr.mxu0 0.0
        %543 = vmatpush1.msra.mxu0 0.0
        %544 = vmatprep.subr.mxu0 0.0
        %545 = vmatpush1.msra.mxu0 0.0
        %546 = vmatprep.subr.mxu0 0.0
        %547 = vmatpush1.msra.mxu0 0.0
        %548 = vmatprep.subr.mxu0 0.0
        %549 = vmatpush1.msra.mxu0 0.0
        %550 = vmatprep.subr.mxu0 0.0
        %551 = vmatpush1.msra.mxu0 0.0
        %552 = vmatprep.subr.mxu0 0.0
        %553 = vmatpush1.msra.mxu0 0.0
        %554 = vmatprep.subr.mxu0 0.0
        %555 = vmatpush1.msra.mxu0 %v522
        %556 = vmatprep.subr.mxu0 0.0
        %557 = vmatpush2.msra.mxu0 0.0
        %558 = vmatprep.subr.mxu0 0.0
        %559 = vmatpush2.msra.mxu0 0.0
        %560 = vmatprep.subr.mxu0 0.0
        %561 = vmatpush2.msra.mxu0 0.0
        %562 = vmatprep.subr.mxu0 0.0
        %563 = vmatpush2.msra.mxu0 0.0
        %564 = vmatprep.subr.mxu0 0.0
        %565 = vmatpush2.msra.mxu0 0.0
        %566 = vmatprep.subr.mxu0 0.0
        %567 = vmatpush2.msra.mxu0 0.0
        %568 = vmatprep.subr.mxu0 0.0
        %569 = vmatpush2.msra.mxu0 0.0
        %570 = vmatprep.subr.mxu0 0.0
        %571 = vmatpush2.msra.mxu0 0.0
        %572 = vmatprep.subr.mxu0 0.0
        %573 = vmatpush2.msra.mxu0 0.0
        %574 = vmatprep.subr.mxu0 0.0
        %575 = vmatpush2.msra.mxu0 0.0
        %576 = vmatprep.subr.mxu0 0.0
        %577 = vmatpush2.msra.mxu0 0.0
        %578 = vmatprep.subr.mxu0 0.0
        %579 = vmatpush2.msra.mxu0 0.0
        %580 = vmatprep.subr.mxu0 0.0
        %581 = vmatpush2.msra.mxu0 0.0
        %582 = vmatprep.subr.mxu0 0.0
        %583 = vmatpush2.msra.mxu0 0.0
        %584 = vmatprep.subr.mxu0 0.0
        %585 = vmatpush2.msra.mxu0 0.0
        %586 = vmatprep.subr.mxu0 0.0
        %587 = vmatpush2.msra.mxu0 0.0
        %588 = vmatprep.mubr.f32.mxu0 0.0
        %589 = vmatmul.mubr.f32.gmra.mxu0 %v518
        %v590 = vpop.f32.mrf.mxu0
        %v591 = vadd.f32 %v514, %v590
        %v592 = vpop.f32.mrf.mxu0
        %593 = vdwg.mxu0
        %594 = vst [vmem:[#allocation5] sm:$0xff] %v591
        %v595 = vld [vmem:[#allocation2] sm:$0x3]
        %v596 = vld [vmem:[#allocation3] sm:$0x3]
        %v597 = vld [vmem:[#allocation5] sm:$0x3]
        %vm598 = vcmask 261120
        %v600 = vsel %vm598, %v595, 0
        %602 = vmatprep.subr.mxu0 0.0
        %603 = vmatpush1.msra.mxu0 0.0
        %604 = vmatprep.subr.mxu0 0.0
        %605 = vmatpush1.msra.mxu0 0.0
        %606 = vmatprep.subr.mxu0 0.0
        %607 = vmatpush1.msra.mxu0 0.0
        %608 = vmatprep.subr.mxu0 0.0
        %609 = vmatpush1.msra.mxu0 0.0
        %610 = vmatprep.subr.mxu0 0.0
        %611 = vmatpush1.msra.mxu0 0.0
        %612 = vmatprep.subr.mxu0 0.0
        %613 = vmatpush1.msra.mxu0 0.0
        %614 = vmatprep.subr.mxu0 0.0
        %615 = vmatpush1.msra.mxu0 0.0
        %616 = vmatprep.subr.mxu0 0.0
        %617 = vmatpush1.msra.mxu0 0.0
        %618 = vmatprep.subr.mxu0 0.0
        %619 = vmatpush1.msra.mxu0 0.0
        %620 = vmatprep.subr.mxu0 0.0
        %621 = vmatpush1.msra.mxu0 0.0
        %622 = vmatprep.subr.mxu0 0.0
        %623 = vmatpush1.msra.mxu0 0.0
        %624 = vmatprep.subr.mxu0 0.0
        %625 = vmatpush1.msra.mxu0 0.0
        %626 = vmatprep.subr.mxu0 0.0
        %627 = vmatpush1.msra.mxu0 %v507
        %628 = vmatprep.subr.mxu0 0.0
        %629 = vmatpush1.msra.mxu0 %v506
        %630 = vmatprep.subr.mxu0 0.0
        %631 = vmatpush1.msra.mxu0 %v505
        %632 = vmatprep.subr.mxu0 0.0
        %633 = vmatpush1.msra.mxu0 %v504
        %634 = vmatprep.subr.mxu0 0.0
        %635 = vmatpush2.msra.mxu0 0.0
        %636 = vmatprep.subr.mxu0 0.0
        %637 = vmatpush2.msra.mxu0 0.0
        %638 = vmatprep.subr.mxu0 0.0
        %639 = vmatpush2.msra.mxu0 0.0
        %640 = vmatprep.subr.mxu0 0.0
        %641 = vmatpush2.msra.mxu0 0.0
        %642 = vmatprep.subr.mxu0 0.0
        %643 = vmatpush2.msra.mxu0 0.0
        %644 = vmatprep.subr.mxu0 0.0
        %645 = vmatpush2.msra.mxu0 0.0
        %646 = vmatprep.subr.mxu0 0.0
        %647 = vmatpush2.msra.mxu0 0.0
        %648 = vmatprep.subr.mxu0 0.0
        %649 = vmatpush2.msra.mxu0 0.0
        %650 = vmatprep.subr.mxu0 0.0
        %651 = vmatpush2.msra.mxu0 0.0
        %652 = vmatprep.subr.mxu0 0.0
        %653 = vmatpush2.msra.mxu0 0.0
        %654 = vmatprep.subr.mxu0 0.0
        %655 = vmatpush2.msra.mxu0 0.0
        %656 = vmatprep.subr.mxu0 0.0
        %657 = vmatpush2.msra.mxu0 0.0
        %658 = vmatprep.subr.mxu0 0.0
        %659 = vmatpush2.msra.mxu0 0.0
        %660 = vmatprep.subr.mxu0 0.0
        %661 = vmatpush2.msra.mxu0 0.0
        %662 = vmatprep.subr.mxu0 0.0
        %663 = vmatpush2.msra.mxu0 0.0
        %664 = vmatprep.subr.mxu0 0.0
        %665 = vmatpush2.msra.mxu0 0.0
        %666 = vmatprep.mubr.f32.mxu0 0.0
        %667 = vmatmul.mubr.f32.gmra.mxu0 %v600
        %v668 = vpop.f32.mrf.mxu0
        %v669 = vadd.f32 0.0, %v668
        %v670 = vpop.f32.mrf.mxu0
        %671 = vdwg.mxu0
        %v672 = vadd.f32 %v597, %v669
        %v673 = vtanh.pop %v672
        %v674 = vxor.u32 %v672, 2147483648
        %v675 = vmul.f32 %v674, 1.442695
        %v676 = vpow.pop %v675
        %v677 = vadd.f32 %v676, 1.0
        %v678 = vrcp.pop %v677
        %v679 = vmul.f32 1.0, %v678
        %v680 = vsel %vm502, %v673, %v679
        %682 = vrot.lane.b32.xlu0 %v596, 32
        %v683 = vpop.permute.xlu0 %682
        %v685 = vmul.f32 %v680, %v683
        %687 = vrot.lane.b32.xlu0 %v680, 64
        %v688 = vpop.permute.xlu0 %687
        %v690 = vmul.f32 %v680, %v688
        %692 = vrot.lane.b32.xlu0 %v690, 32
        %v693 = vpop.permute.xlu0 %692
        %v695 = vadd.f32 %v685, %v693
        %v696 = vtanh.pop %v695
        %698 = vrot.lane.b32.xlu0 %v696, 64
        %v699 = vpop.permute.xlu0 %698
        %v701 = vmul.f32 %v680, %v699
        %703 = vrot.lane.b32.xlu0 %v701, 32
        %v704 = vpop.permute.xlu0 %703
        %vm706 = vcmask 254976
        %707 = vst.msk [vmem:[#allocation4] sm:$0x3] %vm706, %v704
        %s708 = scalar_lea.vmem [#allocation5], 2
        %v709 = vld [vmem:[%s708] sm:$0x3]
        %v710 = vsel %vm598, %v704, 0
        %712 = vmatprep.subr.mxu0 0.0
        %713 = vmatpush1.msra.mxu0 0.0
        %714 = vmatprep.subr.mxu0 0.0
        %715 = vmatpush1.msra.mxu0 0.0
        %716 = vmatprep.subr.mxu0 0.0
        %717 = vmatpush1.msra.mxu0 0.0
        %718 = vmatprep.subr.mxu0 0.0
        %719 = vmatpush1.msra.mxu0 0.0
        %720 = vmatprep.subr.mxu0 0.0
        %721 = vmatpush1.msra.mxu0 0.0
        %722 = vmatprep.subr.mxu0 0.0
        %723 = vmatpush1.msra.mxu0 0.0
        %724 = vmatprep.subr.mxu0 0.0
        %725 = vmatpush1.msra.mxu0 0.0
        %726 = vmatprep.subr.mxu0 0.0
        %727 = vmatpush1.msra.mxu0 0.0
        %728 = vmatprep.subr.mxu0 0.0
        %729 = vmatpush1.msra.mxu0 0.0
        %730 = vmatprep.subr.mxu0 0.0
        %731 = vmatpush1.msra.mxu0 0.0
        %732 = vmatprep.subr.mxu0 0.0
        %733 = vmatpush1.msra.mxu0 0.0
        %734 = vmatprep.subr.mxu0 0.0
        %735 = vmatpush1.msra.mxu0 0.0
        %736 = vmatprep.subr.mxu0 0.0
        %737 = vmatpush1.msra.mxu0 %v507
        %738 = vmatprep.subr.mxu0 0.0
        %739 = vmatpush1.msra.mxu0 %v506
        %740 = vmatprep.subr.mxu0 0.0
        %741 = vmatpush1.msra.mxu0 %v505
        %742 = vmatprep.subr.mxu0 0.0
        %743 = vmatpush1.msra.mxu0 %v504
        %744 = vmatprep.subr.mxu0 0.0
        %745 = vmatpush2.msra.mxu0 0.0
        %746 = vmatprep.subr.mxu0 0.0
        %747 = vmatpush2.msra.mxu0 0.0
        %748 = vmatprep.subr.mxu0 0.0
        %749 = vmatpush2.msra.mxu0 0.0
        %750 = vmatprep.subr.mxu0 0.0
        %751 = vmatpush2.msra.mxu0 0.0
        %752 = vmatprep.subr.mxu0 0.0
        %753 = vmatpush2.msra.mxu0 0.0
        %754 = vmatprep.subr.mxu0 0.0
        %755 = vmatpush2.msra.mxu0 0.0
        %756 = vmatprep.subr.mxu0 0.0
        %757 = vmatpush2.msra.mxu0 0.0
        %758 = vmatprep.subr.mxu0 0.0
        %759 = vmatpush2.msra.mxu0 0.0
        %760 = vmatprep.subr.mxu0 0.0
        %761 = vmatpush2.msra.mxu0 0.0
        %762 = vmatprep.subr.mxu0 0.0
        %763 = vmatpush2.msra.mxu0 0.0
        %764 = vmatprep.subr.mxu0 0.0
        %765 = vmatpush2.msra.mxu0 0.0
        %766 = vmatprep.subr.mxu0 0.0
        %767 = vmatpush2.msra.mxu0 0.0
        %768 = vmatprep.subr.mxu0 0.0
        %769 = vmatpush2.msra.mxu0 0.0
        %770 = vmatprep.subr.mxu0 0.0
        %771 = vmatpush2.msra.mxu0 0.0
        %772 = vmatprep.subr.mxu0 0.0
        %773 = vmatpush2.msra.mxu0 0.0
        %774 = vmatprep.subr.mxu0 0.0
        %775 = vmatpush2.msra.mxu0 0.0
        %776 = vmatprep.mubr.f32.mxu0 0.0
        %777 = vmatmul.mubr.f32.gmra.mxu0 %v710
        %v778 = vpop.f32.mrf.mxu0
        %v779 = vadd.f32 0.0, %v778
        %v780 = vpop.f32.mrf.mxu0
        %781 = vdwg.mxu0
        %v782 = vadd.f32 %v709, %v779
        %v783 = vtanh.pop %v782
        %v784 = vxor.u32 %v782, 2147483648
        %v785 = vmul.f32 %v784, 1.442695
        %v786 = vpow.pop %v785
        %v787 = vadd.f32 %v786, 1.0
        %v788 = vrcp.pop %v787
        %v789 = vmul.f32 1.0, %v788
        %v790 = vsel %vm502, %v783, %v789
        %v791 = vmul.f32 %v790, %v695
        %793 = vrot.lane.b32.xlu0 %v790, 64
        %v794 = vpop.permute.xlu0 %793
        %v796 = vmul.f32 %v790, %v794
        %798 = vrot.lane.b32.xlu0 %v796, 32
        %v799 = vpop.permute.xlu0 %798
        %v801 = vadd.f32 %v791, %v799
        %v802 = vtanh.pop %v801
        %804 = vrot.lane.b32.xlu0 %v802, 64
        %v805 = vpop.permute.xlu0 %804
        %v807 = vmul.f32 %v790, %v805
        %809 = vrot.lane.b32.xlu0 %v807, 32
        %v810 = vpop.permute.xlu0 %809
        %s812 = scalar_lea.vmem [#allocation4], 2
        %813 = vst.msk [vmem:[%s812] sm:$0x3] %vm706, %v810
        %s814 = scalar_lea.vmem [#allocation5], 4
        %v815 = vld [vmem:[%s814] sm:$0x3]
        %v816 = vsel %vm598, %v810, 0
        %818 = vmatprep.subr.mxu0 0.0
        %819 = vmatpush1.msra.mxu0 0.0
        %820 = vmatprep.subr.mxu0 0.0
        %821 = vmatpush1.msra.mxu0 0.0
        %822 = vmatprep.subr.mxu0 0.0
        %823 = vmatpush1.msra.mxu0 0.0
        %824 = vmatprep.subr.mxu0 0.0
        %825 = vmatpush1.msra.mxu0 0.0
        %826 = vmatprep.subr.mxu0 0.0
        %827 = vmatpush1.msra.mxu0 0.0
        %828 = vmatprep.subr.mxu0 0.0
        %829 = vmatpush1.msra.mxu0 0.0
        %830 = vmatprep.subr.mxu0 0.0
        %831 = vmatpush1.msra.mxu0 0.0
        %832 = vmatprep.subr.mxu0 0.0
        %833 = vmatpush1.msra.mxu0 0.0
        %834 = vmatprep.subr.mxu0 0.0
        %835 = vmatpush1.msra.mxu0 0.0
        %836 = vmatprep.subr.mxu0 0.0
        %837 = vmatpush1.msra.mxu0 0.0
        %838 = vmatprep.subr.mxu0 0.0
        %839 = vmatpush1.msra.mxu0 0.0
        %840 = vmatprep.subr.mxu0 0.0
        %841 = vmatpush1.msra.mxu0 0.0
        %842 = vmatprep.subr.mxu0 0.0
        %843 = vmatpush1.msra.mxu0 %v507
        %844 = vmatprep.subr.mxu0 0.0
        %845 = vmatpush1.msra.mxu0 %v506
        %846 = vmatprep.subr.mxu0 0.0
        %847 = vmatpush1.msra.mxu0 %v505
        %848 = vmatprep.subr.mxu0 0.0
        %849 = vmatpush1.msra.mxu0 %v504
        %850 = vmatprep.subr.mxu0 0.0
        %851 = vmatpush2.msra.mxu0 0.0
        %852 = vmatprep.subr.mxu0 0.0
        %853 = vmatpush2.msra.mxu0 0.0
        %854 = vmatprep.subr.mxu0 0.0
        %855 = vmatpush2.msra.mxu0 0.0
        %856 = vmatprep.subr.mxu0 0.0
        %857 = vmatpush2.msra.mxu0 0.0
        %858 = vmatprep.subr.mxu0 0.0
        %859 = vmatpush2.msra.mxu0 0.0
        %860 = vmatprep.subr.mxu0 0.0
        %861 = vmatpush2.msra.mxu0 0.0
        %862 = vmatprep.subr.mxu0 0.0
        %863 = vmatpush2.msra.mxu0 0.0
        %864 = vmatprep.subr.mxu0 0.0
        %865 = vmatpush2.msra.mxu0 0.0
        %866 = vmatprep.subr.mxu0 0.0
        %867 = vmatpush2.msra.mxu0 0.0
        %868 = vmatprep.subr.mxu0 0.0
        %869 = vmatpush2.msra.mxu0 0.0
        %870 = vmatprep.subr.mxu0 0.0
        %871 = vmatpush2.msra.mxu0 0.0
        %872 = vmatprep.subr.mxu0 0.0
        %873 = vmatpush2.msra.mxu0 0.0
        %874 = vmatprep.subr.mxu0 0.0
        %875 = vmatpush2.msra.mxu0 0.0
        %876 = vmatprep.subr.mxu0 0.0
        %877 = vmatpush2.msra.mxu0 0.0
        %878 = vmatprep.subr.mxu0 0.0
        %879 = vmatpush2.msra.mxu0 0.0
        %880 = vmatprep.subr.mxu0 0.0
        %881 = vmatpush2.msra.mxu0 0.0
        %882 = vmatprep.mubr.f32.mxu0 0.0
        %883 = vmatmul.mubr.f32.gmra.mxu0 %v816
        %v884 = vpop.f32.mrf.mxu0
        %v885 = vadd.f32 0.0, %v884
        %v886 = vpop.f32.mrf.mxu0
        %887 = vdwg.mxu0
        %v888 = vadd.f32 %v815, %v885
        %v889 = vtanh.pop %v888
        %v890 = vxor.u32 %v888, 2147483648
        %v891 = vmul.f32 %v890, 1.442695
        %v892 = vpow.pop %v891
        %v893 = vadd.f32 %v892, 1.0
        %v894 = vrcp.pop %v893
        %v895 = vmul.f32 1.0, %v894
        %v896 = vsel %vm502, %v889, %v895
        %v897 = vmul.f32 %v896, %v801
        %899 = vrot.lane.b32.xlu0 %v896, 64
        %v900 = vpop.permute.xlu0 %899
        %v902 = vmul.f32 %v896, %v900
        %904 = vrot.lane.b32.xlu0 %v902, 32
        %v905 = vpop.permute.xlu0 %904
        %v907 = vadd.f32 %v897, %v905
        %v908 = vtanh.pop %v907
        %910 = vrot.lane.b32.xlu0 %v908, 64
        %v911 = vpop.permute.xlu0 %910
        %v913 = vmul.f32 %v896, %v911
        %915 = vrot.lane.b32.xlu0 %v913, 32
        %v916 = vpop.permute.xlu0 %915
        %s918 = scalar_lea.vmem [#allocation4], 4
        %919 = vst.msk [vmem:[%s918] sm:$0x3] %vm706, %v916
        %s920 = scalar_lea.vmem [#allocation5], 6
        %v921 = vld [vmem:[%s920] sm:$0x3]
        %v922 = vsel %vm598, %v916, 0
        %924 = vmatprep.subr.mxu0 0.0
        %925 = vmatpush1.msra.mxu0 0.0
        %926 = vmatprep.subr.mxu0 0.0
        %927 = vmatpush1.msra.mxu0 0.0
        %928 = vmatprep.subr.mxu0 0.0
        %929 = vmatpush1.msra.mxu0 0.0
        %930 = vmatprep.subr.mxu0 0.0
        %931 = vmatpush1.msra.mxu0 0.0
        %932 = vmatprep.subr.mxu0 0.0
        %933 = vmatpush1.msra.mxu0 0.0
        %934 = vmatprep.subr.mxu0 0.0
        %935 = vmatpush1.msra.mxu0 0.0
        %936 = vmatprep.subr.mxu0 0.0
        %937 = vmatpush1.msra.mxu0 0.0
        %938 = vmatprep.subr.mxu0 0.0
        %939 = vmatpush1.msra.mxu0 0.0
        %940 = vmatprep.subr.mxu0 0.0
        %941 = vmatpush1.msra.mxu0 0.0
        %942 = vmatprep.subr.mxu0 0.0
        %943 = vmatpush1.msra.mxu0 0.0
        %944 = vmatprep.subr.mxu0 0.0
        %945 = vmatpush1.msra.mxu0 0.0
        %946 = vmatprep.subr.mxu0 0.0
        %947 = vmatpush1.msra.mxu0 0.0
        %948 = vmatprep.subr.mxu0 0.0
        %949 = vmatpush1.msra.mxu0 %v507
        %950 = vmatprep.subr.mxu0 0.0
        %951 = vmatpush1.msra.mxu0 %v506
        %952 = vmatprep.subr.mxu0 0.0
        %953 = vmatpush1.msra.mxu0 %v505
        %954 = vmatprep.subr.mxu0 0.0
        %955 = vmatpush1.msra.mxu0 %v504
        %956 = vmatprep.subr.mxu0 0.0
        %957 = vmatpush2.msra.mxu0 0.0
        %958 = vmatprep.subr.mxu0 0.0
        %959 = vmatpush2.msra.mxu0 0.0
        %960 = vmatprep.subr.mxu0 0.0
        %961 = vmatpush2.msra.mxu0 0.0
        %962 = vmatprep.subr.mxu0 0.0
        %963 = vmatpush2.msra.mxu0 0.0
        %964 = vmatprep.subr.mxu0 0.0
        %965 = vmatpush2.msra.mxu0 0.0
        %966 = vmatprep.subr.mxu0 0.0
        %967 = vmatpush2.msra.mxu0 0.0
        %968 = vmatprep.subr.mxu0 0.0
        %969 = vmatpush2.msra.mxu0 0.0
        %970 = vmatprep.subr.mxu0 0.0
        %971 = vmatpush2.msra.mxu0 0.0
        %972 = vmatprep.subr.mxu0 0.0
        %973 = vmatpush2.msra.mxu0 0.0
        %974 = vmatprep.subr.mxu0 0.0
        %975 = vmatpush2.msra.mxu0 0.0
        %976 = vmatprep.subr.mxu0 0.0
        %977 = vmatpush2.msra.mxu0 0.0
        %978 = vmatprep.subr.mxu0 0.0
        %979 = vmatpush2.msra.mxu0 0.0
        %980 = vmatprep.subr.mxu0 0.0
        %981 = vmatpush2.msra.mxu0 0.0
        %982 = vmatprep.subr.mxu0 0.0
        %983 = vmatpush2.msra.mxu0 0.0
        %984 = vmatprep.subr.mxu0 0.0
        %985 = vmatpush2.msra.mxu0 0.0
        %986 = vmatprep.subr.mxu0 0.0
        %987 = vmatpush2.msra.mxu0 0.0
        %988 = vmatprep.mubr.f32.mxu0 0.0
        %989 = vmatmul.mubr.f32.gmra.mxu0 %v922
        %v990 = vpop.f32.mrf.mxu0
        %v991 = vadd.f32 0.0, %v990
        %v992 = vpop.f32.mrf.mxu0
        %993 = vdwg.mxu0
        %v994 = vadd.f32 %v921, %v991
        %v995 = vtanh.pop %v994
        %v996 = vxor.u32 %v994, 2147483648
        %v997 = vmul.f32 %v996, 1.442695
        %v998 = vpow.pop %v997
        %v999 = vadd.f32 %v998, 1.0
        %v1000 = vrcp.pop %v999
        %v1001 = vmul.f32 1.0, %v1000
        %v1002 = vsel %vm502, %v995, %v1001
        %v1003 = vmul.f32 %v1002, %v907
        %1005 = vrot.lane.b32.xlu0 %v1002, 64
        %v1006 = vpop.permute.xlu0 %1005
        %v1008 = vmul.f32 %v1002, %v1006
        %1010 = vrot.lane.b32.xlu0 %v1008, 32
        %v1011 = vpop.permute.xlu0 %1010
        %v1013 = vadd.f32 %v1003, %v1011
        %v1014 = vtanh.pop %v1013
        %1016 = vrot.lane.b32.xlu0 %v1014, 64
        %v1017 = vpop.permute.xlu0 %1016
        %v1019 = vmul.f32 %v1002, %v1017
        %1021 = vrot.lane.b32.xlu0 %v1019, 32
        %v1022 = vpop.permute.xlu0 %1021
        %s1024 = scalar_lea.vmem [#allocation4], 6
        %1025 = vst.msk [vmem:[%s1024] sm:$0x3] %vm706, %v1022
        %1026 = vst.msk [vmem:[#allocation2] sm:$0x3] %vm706, %v1022
        %1028 = vrot.lane.b32.xlu0 %v1013, 96
        %v1029 = vpop.permute.xlu0 %1028
        %1031 = vst.msk [vmem:[#allocation3] sm:$0x3] %vm706, %v1029
        %v1032 = vld [vmem:[%s6] sm:$0xff]
        %v1033 = vld [vmem:[%s6 + $0x8] sm:$0xff]
        %v1034 = vld [vmem:[%s6 + $0x10] sm:$0xff]
        %v1035 = vld [vmem:[%s6 + $0x18] sm:$0xff]
        %v1036 = vld [vmem:[#allocation11] sm:$0xff]
        %v1037 = vld [vmem:[#allocation11 + $0x8] sm:$0xff]
        %v1038 = vld [vmem:[#allocation11 + $0x10] sm:$0xff]
        %v1039 = vld [vmem:[#allocation11 + $0x18] sm:$0xff]
        %v1040 = vld [vmem:[#allocation12] sm:$0x1]
        %v1041 = vld [vmem:[#allocation4] sm:$0xff]
        %v1043 = vlaneseq
        %v1044 = vshrl.u32 %v1043, 7
        %v1045 = vsub.s32 0, %v1044
        %v1046 = vrot.slane %v1040, %v1045
        %v1049 = vsel %vm598, %v1041, 0
        %1051 = vmatprep.subr.mxu0 0.0
        %1052 = vmatpush1.msra.mxu0 0.0
        %1053 = vmatprep.subr.mxu0 0.0
        %1054 = vmatpush1.msra.mxu0 0.0
        %1055 = vmatprep.subr.mxu0 0.0
        %1056 = vmatpush1.msra.mxu0 0.0
        %1057 = vmatprep.subr.mxu0 0.0
        %1058 = vmatpush1.msra.mxu0 0.0
        %1059 = vmatprep.subr.mxu0 0.0
        %1060 = vmatpush1.msra.mxu0 0.0
        %1061 = vmatprep.subr.mxu0 0.0
        %1062 = vmatpush1.msra.mxu0 0.0
        %1063 = vmatprep.subr.mxu0 0.0
        %1064 = vmatpush1.msra.mxu0 0.0
        %1065 = vmatprep.subr.mxu0 0.0
        %1066 = vmatpush1.msra.mxu0 0.0
        %1067 = vmatprep.subr.mxu0 0.0
        %1068 = vmatpush1.msra.mxu0 0.0
        %1069 = vmatprep.subr.mxu0 0.0
        %1070 = vmatpush1.msra.mxu0 0.0
        %1071 = vmatprep.subr.mxu0 0.0
        %1072 = vmatpush1.msra.mxu0 0.0
        %1073 = vmatprep.subr.mxu0 0.0
        %1074 = vmatpush1.msra.mxu0 0.0
        %1075 = vmatprep.subr.mxu0 0.0
        %1076 = vmatpush1.msra.mxu0 %v1035
        %1077 = vmatprep.subr.mxu0 0.0
        %1078 = vmatpush1.msra.mxu0 %v1034
        %1079 = vmatprep.subr.mxu0 0.0
        %1080 = vmatpush1.msra.mxu0 %v1033
        %1081 = vmatprep.subr.mxu0 0.0
        %1082 = vmatpush1.msra.mxu0 %v1032
        %1083 = vmatprep.subr.mxu0 0.0
        %1084 = vmatpush2.msra.mxu0 0.0
        %1085 = vmatprep.subr.mxu0 0.0
        %1086 = vmatpush2.msra.mxu0 0.0
        %1087 = vmatprep.subr.mxu0 0.0
        %1088 = vmatpush2.msra.mxu0 0.0
        %1089 = vmatprep.subr.mxu0 0.0
        %1090 = vmatpush2.msra.mxu0 0.0
        %1091 = vmatprep.subr.mxu0 0.0
        %1092 = vmatpush2.msra.mxu0 0.0
        %1093 = vmatprep.subr.mxu0 0.0
        %1094 = vmatpush2.msra.mxu0 0.0
        %1095 = vmatprep.subr.mxu0 0.0
        %1096 = vmatpush2.msra.mxu0 0.0
        %1097 = vmatprep.subr.mxu0 0.0
        %1098 = vmatpush2.msra.mxu0 0.0
        %1099 = vmatprep.subr.mxu0 0.0
        %1100 = vmatpush2.msra.mxu0 0.0
        %1101 = vmatprep.subr.mxu0 0.0
        %1102 = vmatpush2.msra.mxu0 0.0
        %1103 = vmatprep.subr.mxu0 0.0
        %1104 = vmatpush2.msra.mxu0 0.0
        %1105 = vmatprep.subr.mxu0 0.0
        %1106 = vmatpush2.msra.mxu0 0.0
        %1107 = vmatprep.subr.mxu0 0.0
        %1108 = vmatpush2.msra.mxu0 0.0
        %1109 = vmatprep.subr.mxu0 0.0
        %1110 = vmatpush2.msra.mxu0 0.0
        %1111 = vmatprep.subr.mxu0 0.0
        %1112 = vmatpush2.msra.mxu0 0.0
        %1113 = vmatprep.subr.mxu0 0.0
        %1114 = vmatpush2.msra.mxu0 0.0
        %1115 = vmatprep.mubr.f32.mxu0 0.0
        %1116 = vmatmul.mubr.f32.gmra.mxu0 %v1049
        %v1117 = vpop.f32.mrf.mxu0
        %v1118 = vadd.f32 %v1046, %v1117
        %v1119 = vpop.f32.mrf.mxu0
        %1120 = vdwg.mxu0
        %1121 = vst [vmem:[#allocation5] sm:$0xff] %v1118
        %s1122 = scalar_lea.vmem [#allocation2], 2
        %v1123 = vld [vmem:[%s1122] sm:$0x3]
        %s1124 = scalar_lea.vmem [#allocation3], 2
        %v1125 = vld [vmem:[%s1124] sm:$0x3]
        %v1126 = vld [vmem:[#allocation5] sm:$0x3]
        %v1128 = vsel %vm598, %v1123, 0
        %1130 = vmatprep.subr.mxu0 0.0
        %1131 = vmatpush1.msra.mxu0 0.0
        %1132 = vmatprep.subr.mxu0 0.0
        %1133 = vmatpush1.msra.mxu0 0.0
        %1134 = vmatprep.subr.mxu0 0.0
        %1135 = vmatpush1.msra.mxu0 0.0
        %1136 = vmatprep.subr.mxu0 0.0
        %1137 = vmatpush1.msra.mxu0 0.0
        %1138 = vmatprep.subr.mxu0 0.0
        %1139 = vmatpush1.msra.mxu0 0.0
        %1140 = vmatprep.subr.mxu0 0.0
        %1141 = vmatpush1.msra.mxu0 0.0
        %1142 = vmatprep.subr.mxu0 0.0
        %1143 = vmatpush1.msra.mxu0 0.0
        %1144 = vmatprep.subr.mxu0 0.0
        %1145 = vmatpush1.msra.mxu0 0.0
        %1146 = vmatprep.subr.mxu0 0.0
        %1147 = vmatpush1.msra.mxu0 0.0
        %1148 = vmatprep.subr.mxu0 0.0
        %1149 = vmatpush1.msra.mxu0 0.0
        %1150 = vmatprep.subr.mxu0 0.0
        %1151 = vmatpush1.msra.mxu0 0.0
        %1152 = vmatprep.subr.mxu0 0.0
        %1153 = vmatpush1.msra.mxu0 0.0
        %1154 = vmatprep.subr.mxu0 0.0
        %1155 = vmatpush1.msra.mxu0 %v1039
        %1156 = vmatprep.subr.mxu0 0.0
        %1157 = vmatpush1.msra.mxu0 %v1038
        %1158 = vmatprep.subr.mxu0 0.0
        %1159 = vmatpush1.msra.mxu0 %v1037
        %1160 = vmatprep.subr.mxu0 0.0
        %1161 = vmatpush1.msra.mxu0 %v1036
        %1162 = vmatprep.subr.mxu0 0.0
        %1163 = vmatpush2.msra.mxu0 0.0
        %1164 = vmatprep.subr.mxu0 0.0
        %1165 = vmatpush2.msra.mxu0 0.0
        %1166 = vmatprep.subr.mxu0 0.0
        %1167 = vmatpush2.msra.mxu0 0.0
        %1168 = vmatprep.subr.mxu0 0.0
        %1169 = vmatpush2.msra.mxu0 0.0
        %1170 = vmatprep.subr.mxu0 0.0
        %1171 = vmatpush2.msra.mxu0 0.0
        %1172 = vmatprep.subr.mxu0 0.0
        %1173 = vmatpush2.msra.mxu0 0.0
        %1174 = vmatprep.subr.mxu0 0.0
        %1175 = vmatpush2.msra.mxu0 0.0
        %1176 = vmatprep.subr.mxu0 0.0
        %1177 = vmatpush2.msra.mxu0 0.0
        %1178 = vmatprep.subr.mxu0 0.0
        %1179 = vmatpush2.msra.mxu0 0.0
        %1180 = vmatprep.subr.mxu0 0.0
        %1181 = vmatpush2.msra.mxu0 0.0
        %1182 = vmatprep.subr.mxu0 0.0
        %1183 = vmatpush2.msra.mxu0 0.0
        %1184 = vmatprep.subr.mxu0 0.0
        %1185 = vmatpush2.msra.mxu0 0.0
        %1186 = vmatprep.subr.mxu0 0.0
        %1187 = vmatpush2.msra.mxu0 0.0
        %1188 = vmatprep.subr.mxu0 0.0
        %1189 = vmatpush2.msra.mxu0 0.0
        %1190 = vmatprep.subr.mxu0 0.0
        %1191 = vmatpush2.msra.mxu0 0.0
        %1192 = vmatprep.subr.mxu0 0.0
        %1193 = vmatpush2.msra.mxu0 0.0
        %1194 = vmatprep.mubr.f32.mxu0 0.0
        %1195 = vmatmul.mubr.f32.gmra.mxu0 %v1128
        %v1196 = vpop.f32.mrf.mxu0
        %v1197 = vadd.f32 0.0, %v1196
        %v1198 = vpop.f32.mrf.mxu0
        %1199 = vdwg.mxu0
        %v1200 = vadd.f32 %v1126, %v1197
        %v1201 = vtanh.pop %v1200
        %v1202 = vxor.u32 %v1200, 2147483648
        %v1203 = vmul.f32 %v1202, 1.442695
        %v1204 = vpow.pop %v1203
        %v1205 = vadd.f32 %v1204, 1.0
        %v1206 = vrcp.pop %v1205
        %v1207 = vmul.f32 1.0, %v1206
        %v1208 = vsel %vm502, %v1201, %v1207
        %1210 = vrot.lane.b32.xlu0 %v1125, 32
        %v1211 = vpop.permute.xlu0 %1210
        %v1213 = vmul.f32 %v1208, %v1211
        %1215 = vrot.lane.b32.xlu0 %v1208, 64
        %v1216 = vpop.permute.xlu0 %1215
        %v1218 = vmul.f32 %v1208, %v1216
        %1220 = vrot.lane.b32.xlu0 %v1218, 32
        %v1221 = vpop.permute.xlu0 %1220
        %v1223 = vadd.f32 %v1213, %v1221
        %v1224 = vtanh.pop %v1223
        %1226 = vrot.lane.b32.xlu0 %v1224, 64
        %v1227 = vpop.permute.xlu0 %1226
        %v1229 = vmul.f32 %v1208, %v1227
        %v1230 = vld [vmem:[%s708] sm:$0x3]
        %1232 = vrot.lane.b32.xlu0 %v1229, 32
        %v1233 = vpop.permute.xlu0 %1232
        %v1234 = vsel %vm598, %v1233, 0
        %1236 = vmatprep.subr.mxu0 0.0
        %1237 = vmatpush1.msra.mxu0 0.0
        %1238 = vmatprep.subr.mxu0 0.0
        %1239 = vmatpush1.msra.mxu0 0.0
        %1240 = vmatprep.subr.mxu0 0.0
        %1241 = vmatpush1.msra.mxu0 0.0
        %1242 = vmatprep.subr.mxu0 0.0
        %1243 = vmatpush1.msra.mxu0 0.0
        %1244 = vmatprep.subr.mxu0 0.0
        %1245 = vmatpush1.msra.mxu0 0.0
        %1246 = vmatprep.subr.mxu0 0.0
        %1247 = vmatpush1.msra.mxu0 0.0
        %1248 = vmatprep.subr.mxu0 0.0
        %1249 = vmatpush1.msra.mxu0 0.0
        %1250 = vmatprep.subr.mxu0 0.0
        %1251 = vmatpush1.msra.mxu0 0.0
        %1252 = vmatprep.subr.mxu0 0.0
        %1253 = vmatpush1.msra.mxu0 0.0
        %1254 = vmatprep.subr.mxu0 0.0
        %1255 = vmatpush1.msra.mxu0 0.0
        %1256 = vmatprep.subr.mxu0 0.0
        %1257 = vmatpush1.msra.mxu0 0.0
        %1258 = vmatprep.subr.mxu0 0.0
        %1259 = vmatpush1.msra.mxu0 0.0
        %1260 = vmatprep.subr.mxu0 0.0
        %1261 = vmatpush1.msra.mxu0 %v1039
        %1262 = vmatprep.subr.mxu0 0.0
        %1263 = vmatpush1.msra.mxu0 %v1038
        %1264 = vmatprep.subr.mxu0 0.0
        %1265 = vmatpush1.msra.mxu0 %v1037
        %1266 = vmatprep.subr.mxu0 0.0
        %1267 = vmatpush1.msra.mxu0 %v1036
        %1268 = vmatprep.subr.mxu0 0.0
        %1269 = vmatpush2.msra.mxu0 0.0
        %1270 = vmatprep.subr.mxu0 0.0
        %1271 = vmatpush2.msra.mxu0 0.0
        %1272 = vmatprep.subr.mxu0 0.0
        %1273 = vmatpush2.msra.mxu0 0.0
        %1274 = vmatprep.subr.mxu0 0.0
        %1275 = vmatpush2.msra.mxu0 0.0
        %1276 = vmatprep.subr.mxu0 0.0
        %1277 = vmatpush2.msra.mxu0 0.0
        %1278 = vmatprep.subr.mxu0 0.0
        %1279 = vmatpush2.msra.mxu0 0.0
        %1280 = vmatprep.subr.mxu0 0.0
        %1281 = vmatpush2.msra.mxu0 0.0
        %1282 = vmatprep.subr.mxu0 0.0
        %1283 = vmatpush2.msra.mxu0 0.0
        %1284 = vmatprep.subr.mxu0 0.0
        %1285 = vmatpush2.msra.mxu0 0.0
        %1286 = vmatprep.subr.mxu0 0.0
        %1287 = vmatpush2.msra.mxu0 0.0
        %1288 = vmatprep.subr.mxu0 0.0
        %1289 = vmatpush2.msra.mxu0 0.0
        %1290 = vmatprep.subr.mxu0 0.0
        %1291 = vmatpush2.msra.mxu0 0.0
        %1292 = vmatprep.subr.mxu0 0.0
        %1293 = vmatpush2.msra.mxu0 0.0
        %1294 = vmatprep.subr.mxu0 0.0
        %1295 = vmatpush2.msra.mxu0 0.0
        %1296 = vmatprep.subr.mxu0 0.0
        %1297 = vmatpush2.msra.mxu0 0.0
        %1298 = vmatprep.subr.mxu0 0.0
        %1299 = vmatpush2.msra.mxu0 0.0
        %1300 = vmatprep.mubr.f32.mxu0 0.0
        %1301 = vmatmul.mubr.f32.gmra.mxu0 %v1234
        %v1302 = vpop.f32.mrf.mxu0
        %v1303 = vadd.f32 0.0, %v1302
        %v1304 = vpop.f32.mrf.mxu0
        %1305 = vdwg.mxu0
        %v1306 = vadd.f32 %v1230, %v1303
        %v1307 = vtanh.pop %v1306
        %v1308 = vxor.u32 %v1306, 2147483648
        %v1309 = vmul.f32 %v1308, 1.442695
        %v1310 = vpow.pop %v1309
        %v1311 = vadd.f32 %v1310, 1.0
        %v1312 = vrcp.pop %v1311
        %v1313 = vmul.f32 1.0, %v1312
        %v1314 = vsel %vm502, %v1307, %v1313
        %v1315 = vmul.f32 %v1314, %v1223
        %1317 = vrot.lane.b32.xlu0 %v1314, 64
        %v1318 = vpop.permute.xlu0 %1317
        %v1320 = vmul.f32 %v1314, %v1318
        %1322 = vrot.lane.b32.xlu0 %v1320, 32
        %v1323 = vpop.permute.xlu0 %1322
        %v1325 = vadd.f32 %v1315, %v1323
        %v1326 = vtanh.pop %v1325
        %1328 = vrot.lane.b32.xlu0 %v1326, 64
        %v1329 = vpop.permute.xlu0 %1328
        %v1331 = vmul.f32 %v1314, %v1329
        %v1332 = vld [vmem:[%s814] sm:$0x3]
        %1334 = vrot.lane.b32.xlu0 %v1331, 32
        %v1335 = vpop.permute.xlu0 %1334
        %v1336 = vsel %vm598, %v1335, 0
        %1338 = vmatprep.subr.mxu0 0.0
        %1339 = vmatpush1.msra.mxu0 0.0
        %1340 = vmatprep.subr.mxu0 0.0
        %1341 = vmatpush1.msra.mxu0 0.0
        %1342 = vmatprep.subr.mxu0 0.0
        %1343 = vmatpush1.msra.mxu0 0.0
        %1344 = vmatprep.subr.mxu0 0.0
        %1345 = vmatpush1.msra.mxu0 0.0
        %1346 = vmatprep.subr.mxu0 0.0
        %1347 = vmatpush1.msra.mxu0 0.0
        %1348 = vmatprep.subr.mxu0 0.0
        %1349 = vmatpush1.msra.mxu0 0.0
        %1350 = vmatprep.subr.mxu0 0.0
        %1351 = vmatpush1.msra.mxu0 0.0
        %1352 = vmatprep.subr.mxu0 0.0
        %1353 = vmatpush1.msra.mxu0 0.0
        %1354 = vmatprep.subr.mxu0 0.0
        %1355 = vmatpush1.msra.mxu0 0.0
        %1356 = vmatprep.subr.mxu0 0.0
        %1357 = vmatpush1.msra.mxu0 0.0
        %1358 = vmatprep.subr.mxu0 0.0
        %1359 = vmatpush1.msra.mxu0 0.0
        %1360 = vmatprep.subr.mxu0 0.0
        %1361 = vmatpush1.msra.mxu0 0.0
        %1362 = vmatprep.subr.mxu0 0.0
        %1363 = vmatpush1.msra.mxu0 %v1039
        %1364 = vmatprep.subr.mxu0 0.0
        %1365 = vmatpush1.msra.mxu0 %v1038
        %1366 = vmatprep.subr.mxu0 0.0
        %1367 = vmatpush1.msra.mxu0 %v1037
        %1368 = vmatprep.subr.mxu0 0.0
        %1369 = vmatpush1.msra.mxu0 %v1036
        %1370 = vmatprep.subr.mxu0 0.0
        %1371 = vmatpush2.msra.mxu0 0.0
        %1372 = vmatprep.subr.mxu0 0.0
        %1373 = vmatpush2.msra.mxu0 0.0
        %1374 = vmatprep.subr.mxu0 0.0
        %1375 = vmatpush2.msra.mxu0 0.0
        %1376 = vmatprep.subr.mxu0 0.0
        %1377 = vmatpush2.msra.mxu0 0.0
        %1378 = vmatprep.subr.mxu0 0.0
        %1379 = vmatpush2.msra.mxu0 0.0
        %1380 = vmatprep.subr.mxu0 0.0
        %1381 = vmatpush2.msra.mxu0 0.0
        %1382 = vmatprep.subr.mxu0 0.0
        %1383 = vmatpush2.msra.mxu0 0.0
        %1384 = vmatprep.subr.mxu0 0.0
        %1385 = vmatpush2.msra.mxu0 0.0
        %1386 = vmatprep.subr.mxu0 0.0
        %1387 = vmatpush2.msra.mxu0 0.0
        %1388 = vmatprep.subr.mxu0 0.0
        %1389 = vmatpush2.msra.mxu0 0.0
        %1390 = vmatprep.subr.mxu0 0.0
        %1391 = vmatpush2.msra.mxu0 0.0
        %1392 = vmatprep.subr.mxu0 0.0
        %1393 = vmatpush2.msra.mxu0 0.0
        %1394 = vmatprep.subr.mxu0 0.0
        %1395 = vmatpush2.msra.mxu0 0.0
        %1396 = vmatprep.subr.mxu0 0.0
        %1397 = vmatpush2.msra.mxu0 0.0
        %1398 = vmatprep.subr.mxu0 0.0
        %1399 = vmatpush2.msra.mxu0 0.0
        %1400 = vmatprep.subr.mxu0 0.0
        %1401 = vmatpush2.msra.mxu0 0.0
        %1402 = vmatprep.mubr.f32.mxu0 0.0
        %1403 = vmatmul.mubr.f32.gmra.mxu0 %v1336
        %v1404 = vpop.f32.mrf.mxu0
        %v1405 = vadd.f32 0.0, %v1404
        %v1406 = vpop.f32.mrf.mxu0
        %1407 = vdwg.mxu0
        %v1408 = vadd.f32 %v1332, %v1405
        %v1409 = vtanh.pop %v1408
        %v1410 = vxor.u32 %v1408, 2147483648
        %v1411 = vmul.f32 %v1410, 1.442695
        %v1412 = vpow.pop %v1411
        %v1413 = vadd.f32 %v1412, 1.0
        %v1414 = vrcp.pop %v1413
        %v1415 = vmul.f32 1.0, %v1414
        %v1416 = vsel %vm502, %v1409, %v1415
        %v1417 = vmul.f32 %v1416, %v1325
        %1419 = vrot.lane.b32.xlu0 %v1416, 64
        %v1420 = vpop.permute.xlu0 %1419
        %v1422 = vmul.f32 %v1416, %v1420
        %1424 = vrot.lane.b32.xlu0 %v1422, 32
        %v1425 = vpop.permute.xlu0 %1424
        %v1427 = vadd.f32 %v1417, %v1425
        %v1428 = vtanh.pop %v1427
        %1430 = vrot.lane.b32.xlu0 %v1428, 64
        %v1431 = vpop.permute.xlu0 %1430
        %v1433 = vmul.f32 %v1416, %v1431
        %v1434 = vld [vmem:[%s920] sm:$0x3]
        %1436 = vrot.lane.b32.xlu0 %v1433, 32
        %v1437 = vpop.permute.xlu0 %1436
        %v1438 = vsel %vm598, %v1437, 0
        %1440 = vmatprep.subr.mxu0 0.0
        %1441 = vmatpush1.msra.mxu0 0.0
        %1442 = vmatprep.subr.mxu0 0.0
        %1443 = vmatpush1.msra.mxu0 0.0
        %1444 = vmatprep.subr.mxu0 0.0
        %1445 = vmatpush1.msra.mxu0 0.0
        %1446 = vmatprep.subr.mxu0 0.0
        %1447 = vmatpush1.msra.mxu0 0.0
        %1448 = vmatprep.subr.mxu0 0.0
        %1449 = vmatpush1.msra.mxu0 0.0
        %1450 = vmatprep.subr.mxu0 0.0
        %1451 = vmatpush1.msra.mxu0 0.0
        %1452 = vmatprep.subr.mxu0 0.0
        %1453 = vmatpush1.msra.mxu0 0.0
        %1454 = vmatprep.subr.mxu0 0.0
        %1455 = vmatpush1.msra.mxu0 0.0
        %1456 = vmatprep.subr.mxu0 0.0
        %1457 = vmatpush1.msra.mxu0 0.0
        %1458 = vmatprep.subr.mxu0 0.0
        %1459 = vmatpush1.msra.mxu0 0.0
        %1460 = vmatprep.subr.mxu0 0.0
        %1461 = vmatpush1.msra.mxu0 0.0
        %1462 = vmatprep.subr.mxu0 0.0
        %1463 = vmatpush1.msra.mxu0 0.0
        %1464 = vmatprep.subr.mxu0 0.0
        %1465 = vmatpush1.msra.mxu0 %v1039
        %1466 = vmatprep.subr.mxu0 0.0
        %1467 = vmatpush1.msra.mxu0 %v1038
        %1468 = vmatprep.subr.mxu0 0.0
        %1469 = vmatpush1.msra.mxu0 %v1037
        %1470 = vmatprep.subr.mxu0 0.0
        %1471 = vmatpush1.msra.mxu0 %v1036
        %1472 = vmatprep.subr.mxu0 0.0
        %1473 = vmatpush2.msra.mxu0 0.0
        %1474 = vmatprep.subr.mxu0 0.0
        %1475 = vmatpush2.msra.mxu0 0.0
        %1476 = vmatprep.subr.mxu0 0.0
        %1477 = vmatpush2.msra.mxu0 0.0
        %1478 = vmatprep.subr.mxu0 0.0
        %1479 = vmatpush2.msra.mxu0 0.0
        %1480 = vmatprep.subr.mxu0 0.0
        %1481 = vmatpush2.msra.mxu0 0.0
        %1482 = vmatprep.subr.mxu0 0.0
        %1483 = vmatpush2.msra.mxu0 0.0
        %1484 = vmatprep.subr.mxu0 0.0
        %1485 = vmatpush2.msra.mxu0 0.0
        %1486 = vmatprep.subr.mxu0 0.0
        %1487 = vmatpush2.msra.mxu0 0.0
        %1488 = vmatprep.subr.mxu0 0.0
        %1489 = vmatpush2.msra.mxu0 0.0
        %1490 = vmatprep.subr.mxu0 0.0
        %1491 = vmatpush2.msra.mxu0 0.0
        %1492 = vmatprep.subr.mxu0 0.0
        %1493 = vmatpush2.msra.mxu0 0.0
        %1494 = vmatprep.subr.mxu0 0.0
        %1495 = vmatpush2.msra.mxu0 0.0
        %1496 = vmatprep.subr.mxu0 0.0
        %1497 = vmatpush2.msra.mxu0 0.0
        %1498 = vmatprep.subr.mxu0 0.0
        %1499 = vmatpush2.msra.mxu0 0.0
        %1500 = vmatprep.subr.mxu0 0.0
        %1501 = vmatpush2.msra.mxu0 0.0
        %1502 = vmatprep.subr.mxu0 0.0
        %1503 = vmatpush2.msra.mxu0 0.0
        %1504 = vmatprep.mubr.f32.mxu0 0.0
        %1505 = vmatmul.mubr.f32.gmra.mxu0 %v1438
        %v1506 = vpop.f32.mrf.mxu0
        %v1507 = vadd.f32 0.0, %v1506
        %v1508 = vpop.f32.mrf.mxu0
        %1509 = vdwg.mxu0
        %v1510 = vadd.f32 %v1434, %v1507
        %v1511 = vtanh.pop %v1510
        %v1512 = vxor.u32 %v1510, 2147483648
        %v1513 = vmul.f32 %v1512, 1.442695
        %v1514 = vpow.pop %v1513
        %v1515 = vadd.f32 %v1514, 1.0
        %v1516 = vrcp.pop %v1515
        %v1517 = vmul.f32 1.0, %v1516
        %v1518 = vsel %vm502, %v1511, %v1517
        %v1519 = vmul.f32 %v1518, %v1427
        %1521 = vrot.lane.b32.xlu0 %v1518, 64
        %v1522 = vpop.permute.xlu0 %1521
        %v1524 = vmul.f32 %v1518, %v1522
        %1526 = vrot.lane.b32.xlu0 %v1524, 32
        %v1527 = vpop.permute.xlu0 %1526
        %v1529 = vadd.f32 %v1519, %v1527
        %v1530 = vtanh.pop %v1529
        %1532 = vrot.lane.b32.xlu0 %v1530, 64
        %v1533 = vpop.permute.xlu0 %1532
        %v1535 = vmul.f32 %v1518, %v1533
        %1537 = vrot.lane.b32.xlu0 %v1535, 32
        %v1538 = vpop.permute.xlu0 %1537
        %1540 = vst.msk [vmem:[%s1122] sm:$0x3] %vm706, %v1538
        %1542 = vrot.lane.b32.xlu0 %v1529, 96
        %v1543 = vpop.permute.xlu0 %1542
        %1545 = vst.msk [vmem:[%s1124] sm:$0x3] %vm706, %v1543
        %p1546 = scmp.eq.s32.totalorder %s30, 1
        // Predicated region
        $region89: #{_lambda_.1} parent=63 // pred_check
          %p1547 = pneg %p1546
        $region90: #{_lambda_.1} parent=63 // pred_check_branch
          %1549 = sbr.rel (%p1547) target = $region92
        $region91: #{_lambda_.1} parent=63 // pred_region
          %v1550 = vld [vmem:[%s9] sm:$0xff]
          %v1551 = vld [vmem:[%s9 + $0x8] sm:$0xff]
          %v1552 = vld [vmem:[%s9 + $0x10] sm:$0xff]
          %v1553 = vld [vmem:[%s9 + $0x18] sm:$0xff]
          %v1554 = vld [vmem:[#allocation14] sm:$0x1]
          %v1555 = vld [vmem:[%s1122] sm:$0x3]
          %v1557 = vlaneseq
          %v1558 = vshrl.u32 %v1557, 7
          %v1559 = vsub.s32 0, %v1558
          %v1560 = vrot.slane %v1554, %v1559
          %v1563 = vsel %vm598, %v1555, 0
          %1565 = vmatprep.subr.mxu0 0.0
          %1566 = vmatpush1.msra.mxu0 0.0
          %1567 = vmatprep.subr.mxu0 0.0
          %1568 = vmatpush1.msra.mxu0 0.0
          %1569 = vmatprep.subr.mxu0 0.0
          %1570 = vmatpush1.msra.mxu0 0.0
          %1571 = vmatprep.subr.mxu0 0.0
          %1572 = vmatpush1.msra.mxu0 0.0
          %1573 = vmatprep.subr.mxu0 0.0
          %1574 = vmatpush1.msra.mxu0 0.0
          %1575 = vmatprep.subr.mxu0 0.0
          %1576 = vmatpush1.msra.mxu0 0.0
          %1577 = vmatprep.subr.mxu0 0.0
          %1578 = vmatpush1.msra.mxu0 0.0
          %1579 = vmatprep.subr.mxu0 0.0
          %1580 = vmatpush1.msra.mxu0 0.0
          %1581 = vmatprep.subr.mxu0 0.0
          %1582 = vmatpush1.msra.mxu0 0.0
          %1583 = vmatprep.subr.mxu0 0.0
          %1584 = vmatpush1.msra.mxu0 0.0
          %1585 = vmatprep.subr.mxu0 0.0
          %1586 = vmatpush1.msra.mxu0 0.0
          %1587 = vmatprep.subr.mxu0 0.0
          %1588 = vmatpush1.msra.mxu0 0.0
          %1589 = vmatprep.subr.mxu0 0.0
          %1590 = vmatpush1.msra.mxu0 %v1553
          %1591 = vmatprep.subr.mxu0 0.0
          %1592 = vmatpush1.msra.mxu0 %v1552
          %1593 = vmatprep.subr.mxu0 0.0
          %1594 = vmatpush1.msra.mxu0 %v1551
          %1595 = vmatprep.subr.mxu0 0.0
          %1596 = vmatpush1.msra.mxu0 %v1550
          %1597 = vmatprep.subr.mxu0 0.0
          %1598 = vmatpush2.msra.mxu0 0.0
          %1599 = vmatprep.subr.mxu0 0.0
          %1600 = vmatpush2.msra.mxu0 0.0
          %1601 = vmatprep.subr.mxu0 0.0
          %1602 = vmatpush2.msra.mxu0 0.0
          %1603 = vmatprep.subr.mxu0 0.0
          %1604 = vmatpush2.msra.mxu0 0.0
          %1605 = vmatprep.subr.mxu0 0.0
          %1606 = vmatpush2.msra.mxu0 0.0
          %1607 = vmatprep.subr.mxu0 0.0
          %1608 = vmatpush2.msra.mxu0 0.0
          %1609 = vmatprep.subr.mxu0 0.0
          %1610 = vmatpush2.msra.mxu0 0.0
          %1611 = vmatprep.subr.mxu0 0.0
          %1612 = vmatpush2.msra.mxu0 0.0
          %1613 = vmatprep.subr.mxu0 0.0
          %1614 = vmatpush2.msra.mxu0 0.0
          %1615 = vmatprep.subr.mxu0 0.0
          %1616 = vmatpush2.msra.mxu0 0.0
          %1617 = vmatprep.subr.mxu0 0.0
          %1618 = vmatpush2.msra.mxu0 0.0
          %1619 = vmatprep.subr.mxu0 0.0
          %1620 = vmatpush2.msra.mxu0 0.0
          %1621 = vmatprep.subr.mxu0 0.0
          %1622 = vmatpush2.msra.mxu0 0.0
          %1623 = vmatprep.subr.mxu0 0.0
          %1624 = vmatpush2.msra.mxu0 0.0
          %1625 = vmatprep.subr.mxu0 0.0
          %1626 = vmatpush2.msra.mxu0 0.0
          %1627 = vmatprep.subr.mxu0 0.0
          %1628 = vmatpush2.msra.mxu0 0.0
          %1629 = vmatprep.mubr.f32.mxu0 0.0
          %1630 = vmatmul.mubr.f32.gmra.mxu0 %v1563
          %v1631 = vpop.f32.mrf.mxu0
          %v1632 = vadd.f32 %v1560, %v1631
          %v1633 = vpop.f32.mrf.mxu0
          %1634 = vdwg.mxu0
          %vm1635 = vcmask 33792
          %v1636 = vsel %vm1635, %v1632, -inf
          %1637 = vmax.xlane.f32.xlu0 %v1636
          %v1638 = vpop.xlane.xlu0 %1637
          %v1639 = vsub.f32 %v1632, %v1638
          %v1640 = vmul.f32 %v1639, 1.442695
          %v1641 = vpow.pop %v1640
          %v1642 = vsel %vm1635, %v1641, 0.0
          %1643 = vadd.xlane.f32.xlu0 %v1642
          %v1644 = vpop.xlane.xlu0 %1643
          %v1645 = vlog2.pop %v1644
          %v1646 = vmul.f32 %v1645, 0.6931472
          %v1647 = vsub.f32 %v1639, %v1646
          %1648 = vst.msk [vmem:[#allocation15] sm:$0x3] %vm1635, %v1647
          %v1649 = vld [vmem:[#allocation2] sm:$0x3]
          %v1650 = vld [vmem:[#allocation2 + $0x2] sm:$0x3]
          %1651 = vst.msk [vmem:[#allocation16] sm:$0x3] %vm706, %v1649
          %1652 = vst.msk [vmem:[#allocation16 + $0x2] sm:$0x3] %vm706, %v1650
          %v1653 = vld [vmem:[#allocation3] sm:$0x3]
          %v1654 = vld [vmem:[#allocation3 + $0x2] sm:$0x3]
          %1655 = vst.msk [vmem:[#allocation18] sm:$0x3] %vm706, %v1653
          %1656 = vst.msk [vmem:[#allocation18 + $0x2] sm:$0x3] %vm706, %v1654
        $region92: #{_lambda_.1} parent=63 // pred_fallthru
          _
        // Predicated region
        $region93: #{_lambda_.1} parent=63 // pred_check
          %p1657 = pneg %p279
        $region94: #{_lambda_.1} parent=63 // pred_check_branch
          %1659 = sbr.rel (%p1657) target = $region96
        $region95: #{_lambda_.1} parent=63 // pred_region
          %s1661 = ssub.s32 32, 32
          %1662 = vsyncadd [#allocation8], %s1661
          %s1664 = sshll.u32 [#allocation15], 4
          %s1665 = int_to_ptr.vmem [resolvable:$true] %s1664
          %1667 = dma.vmem_to_hbm [thread:$0]  %s1665, 32, %s11, [#allocation8]
        $region96: #{_lambda_.1} parent=63 // pred_fallthru
          _
        // Predicated region
        $region97: #{_lambda_.1} parent=63 // pred_check
          %p1668 = pneg %p300
        $region98: #{_lambda_.1} parent=63 // pred_check_branch
          %1670 = sbr.rel (%p1668) target = $region100
        $region99: #{_lambda_.1} parent=63 // pred_region
          %s1672 = ssub.s32 64, 64
          %1673 = vsyncadd [#allocation17], %s1672
          %s1674 = sshll.u32 [#allocation16], 4
          %s1675 = int_to_ptr.vmem [resolvable:$true] %s1674
          %1680 = dma.vmem_to_hbm [thread:$0]  %s1675, 64, %s12, [#allocation17], 32, 32, 2
        $region100: #{_lambda_.1} parent=63 // pred_fallthru
          _
        // Predicated region
        $region101: #{_lambda_.1} parent=63 // pred_check
          %p1681 = pneg %p321
        $region102: #{_lambda_.1} parent=63 // pred_check_branch
          %1683 = sbr.rel (%p1681) target = $region104
        $region103: #{_lambda_.1} parent=63 // pred_region
          %s1685 = ssub.s32 64, 64
          %1686 = vsyncadd [#allocation17], %s1685
          %s1687 = sshll.u32 [#allocation18], 4
          %s1688 = int_to_ptr.vmem [resolvable:$true] %s1687
          %1693 = dma.vmem_to_hbm [thread:$0]  %s1688, 64, %s13, [#allocation17], 32, 32, 2
        $region104: #{_lambda_.1} parent=63 // pred_fallthru
          _
        // Predicated region
        $region105: #{_lambda_.1} parent=63 // pred_check
          %p1694 = pneg %p279
        $region106: #{_lambda_.1} parent=63 // pred_check_branch
          %1696 = sbr.rel (%p1694) target = $region108
        $region107: #{_lambda_.1} parent=63 // pred_region
          %1697 = dma.done [#allocation8], 32
        $region108: #{_lambda_.1} parent=63 // pred_fallthru
          _
        // Predicated region
        $region109: #{_lambda_.1} parent=63 // pred_check
          %p1698 = pneg %p300
        $region110: #{_lambda_.1} parent=63 // pred_check_branch
          %1700 = sbr.rel (%p1698) target = $region112
        $region111: #{_lambda_.1} parent=63 // pred_region
          %1701 = dma.done [#allocation17], 64
        $region112: #{_lambda_.1} parent=63 // pred_fallthru
          _
        // Predicated region
        $region113: #{_lambda_.1} parent=63 // pred_check
          %p1702 = pneg %p321
        $region114: #{_lambda_.1} parent=63 // pred_check_branch
          %1704 = sbr.rel (%p1702) target = $region116
        $region115: #{_lambda_.1} parent=63 // pred_region
          %1705 = dma.done [#allocation17], 64
        $region116: #{_lambda_.1} parent=63 // pred_fallthru
          _
      $region64: #{_lambda_.1} parent=5 // pred_fallthru
        _
      %p1706 = scmp.le.s32.totalorder 2, %s25
      // Predicated region
      $region117: #{_lambda_.1} parent=5 // pred_check
        %p1707 = pneg %p1706
      $region118: #{_lambda_.1} parent=5 // pred_check_branch
        %1709 = sbr.rel (%p1707) target = $region120
      $region119: #{_lambda_.1} parent=5 // pred_region
        %s1710 = ssub.s32 %s25, 2
      $region120: #{_lambda_.1} parent=5 // pred_fallthru
        _
    $region6: #{_lambda_.1} parent=1 // loop_footer
      %s29 = sadd.s32 1, %s25
    $region7: #{_lambda_.1} parent=1 // loop_footer_branch
      %24 = sbr.rel target = $region3
    $region8: #{_lambda_.1} parent=1 // loop_exit
      _
    %1711 = vsyncpa [#allocation7], 1
    %s1712 = scalar_lea.sflag [#allocation7], 1
    %1713 = vsyncpa %s1712, 1
    %1714 = vsyncpa [#allocation10], 1
    %1715 = vsyncpa [#allocation13], 1
    %1716 = vsyncpa [#allocation8], 1
    %s1717 = scalar_lea.sflag [#allocation8], 1
    %1718 = vsyncpa %s1717, 1
    %1719 = vsyncpa [#allocation17], 1

</llo_original>
